<compile_context>
chip_gen: v5e
topology: v5e:2x2
jax: 0.10.0
libtpu: 0.0.40
codegen_flags: <defaults>
</compile_context>

<pallas_src>
import jax
import jax.numpy as jnp
from jax.experimental import pallas as pl
from jax.experimental.pallas import tpu as pltpu

# ----------------------------- module config -------------------------------
D_FEATURE = 16
D_IN = 9          # points(3) + view_dirs(3) + normals(3)
D_OUT = 3
D_HIDDEN = 32
N_LAYERS = 2
MULTIRES_VIEW = 4
SCALE = 1.0
MODE = "idr"
SQUEEZE_OUT = True

N_RAYS = 256
LANE = 128
MAX_TILE = 2048   # rays per grid step (lane axis); large tiles amortize ~0.35us/step

EMBED_CH = 3 + 3 * 2 * MULTIRES_VIEW  # 27 (raw vd + sin/cos per frequency)


# ----------------------- frequency embedder (reference glue) ----------------
def frequency_embed(x, multires):
    """NeRF/IDR get_embedder: [x, sin(2^0 x), cos(2^0 x), ..., sin(2^(L-1) x), cos(2^(L-1) x)]."""
    outs = [x]
    for k in range(multires):
        f = jnp.float32(2.0 ** k)
        outs.append(jnp.sin(x * f))
        outs.append(jnp.cos(x * f))
    return jnp.concatenate(outs, axis=-1)


# ------------------------------ Pallas kernel ------------------------------
def render_mlp_kernel(pts_ref, vd_ref, nrm_ref, feat_ref, *refs):
    """Fused (embed + concat-free MLP) forward in transposed (C, tile) layout.

    refs layout (weights are (out, in), biases (out, 1)):
      [w0_pts, w0_vd,
       (w0_sin_k, w0_cos_k) for k in range(MULTIRES_VIEW),
       w0_nrm, w0_feat, b0,
       (w_l, b_l) for the remaining linear layers,
       out_ref]
    """
    *prefs, out_ref = refs
    f32 = jnp.float32

    # Raw inputs -> f32 (elementwise math stays f32 on every TPU generation).
    pts = pts_ref[...].astype(f32) * SCALE       # (3, tile)
    vd = vd_ref[...].astype(f32)                 # (3, tile)
    nrm = nrm_ref[...].astype(f32)               # (3, tile)
    feat = feat_ref[...].astype(f32)             # (16, tile)

    idx = [0]

    def nxt():
        r = prefs[idx[0]]
        idx[0] += 1
        return r[...].astype(f32)

    # ---- layer 0: summed partial matmuls x^T = sum_g W0_g^T @ inp_g^T ----
    acc = jnp.dot(nxt(), pts, preferred_element_type=f32)          # (D_HIDDEN, tile)
    acc = acc + jnp.dot(nxt(), vd, preferred_element_type=f32)
    for k in range(MULTIRES_VIEW):
        freq = f32(2.0 ** k)
        # sin/cos ride the EUP slot; lane-dense layout keeps the vreg count tiny.
        acc = acc + jnp.dot(nxt(), jnp.sin(vd * freq), preferred_element_type=f32)
        acc = acc + jnp.dot(nxt(), jnp.cos(vd * freq), preferred_element_type=f32)
    acc = acc + jnp.dot(nxt(), nrm, preferred_element_type=f32)
    acc = acc + jnp.dot(nxt(), feat, preferred_element_type=f32)
    x = jnp.maximum(acc + nxt(), 0.0)  # + b0 (D_HIDDEN,1 broadcast over lanes), ReLU

    # ---- remaining linear layers (weights stored transposed: (out, in)) ----
    n_rest = (len(prefs) - idx[0]) // 2
    for l in range(n_rest):
        w = nxt()
        b = nxt()
        x = jnp.dot(w, x, preferred_element_type=f32) + b
        if l < n_rest - 1:
            x = jnp.maximum(x, 0.0)  # ReLU

    if SQUEEZE_OUT:
        # Numerically-stable sigmoid: exp(-|x|) never overflows; exp goes to the EUP.
        e = jnp.exp(-jnp.abs(x))
        x = jnp.where(x >= 0, 1.0 / (1.0 + e), e / (1.0 + e))

    out_ref[...] = x.astype(out_ref.dtype)       # (D_OUT, tile), lane-dense store


# ------------------------------ tiling helper --------------------------------
def _round_up(x, m):
    return pl.cdiv(x, m) * m


def _pick_tile(n, max_tile=MAX_TILE):
    """Largest lane tile (multiple of 128) up to max_tile; keep >= 2 grid steps
    when possible so both v7x TensorCores get work."""
    n128 = _round_up(max(n, 1), LANE)
    tile = min(max_tile, n128)
    if n128 // tile < 2 and n128 >= 2 * LANE:
        tile = _round_up(n128 // 2, LANE)
    return tile


# ------------------------------ wrapper (glue) --------------------------------
def rendering_network_forward(points, normals, view_dirs, feature_vectors, params,
                              *, compute_dtype=jnp.float32, max_tile=MAX_TILE):
    """Matches RenderingNetwork.forward for mode='idr', frequency encoding."""
    if MODE != "idr":
        raise NotImplementedError(MODE)  # TODO(synk): no_view_dir / no_normal variants

    n = points.shape[0]
    tile = _pick_tile(n, max_tile)
    padded_n = _round_up(n, tile)

    def prep(a):
        # Transpose so the big ray axis lands on the 128-lane axis, pad ragged N.
        a = a.T.astype(compute_dtype)                      # (C, N)
        if padded_n != n:
            a = jnp.pad(a, ((0, 0), (0, padded_n - n)))
        return a

    pts = prep(points)
    vd = prep(view_dirs)
    nrm = prep(normals)
    feat = prep(feature_vectors)

    # Split W0 by input group at trace time so the kernel never concatenates.
    # x layout in the reference: [pts(3), vd(3), (sin_k, cos_k)*L (6L), nrm(3), feat(16)].
    (w0, b0) = params[0]                                   # w0: (in, out), b0: (1, out)
    w0t = w0.T.astype(compute_dtype)                       # (out, in) = (D_HIDDEN, 49)
    flat_params = [w0t[:, 0:3], w0t[:, 3:6]]
    for k in range(MULTIRES_VIEW):
        base = 6 + 6 * k
        flat_params += [w0t[:, base:base + 3], w0t[:, base + 3:base + 6]]
    off = 6 + 6 * MULTIRES_VIEW
    flat_params += [w0t[:, off:off + 3], w0t[:, off + 3:],
                    b0.reshape(-1, 1).astype(compute_dtype)]
    for (w, b) in params[1:]:
        flat_params += [w.T.astype(compute_dtype), b.reshape(-1, 1).astype(compute_dtype)]

    grid = (padded_n // tile,)

    def col_spec(rows):
        return pl.BlockSpec((rows, tile), lambda i: (0, i))

    in_specs = [col_spec(3), col_spec(3), col_spec(3), col_spec(feat.shape[0])]
    in_specs += [pl.BlockSpec(p.shape, lambda i: (0, 0)) for p in flat_params]
    out_spec = pl.BlockSpec((D_OUT, tile), lambda i: (0, i))

    # Advisory cost estimate so XLA can overlap this tiny, overhead-bound kernel.
    d0_eff = D_IN + 6 * MULTIRES_VIEW + D_FEATURE          # 49
    flops = 2 * padded_n * (d0_eff * D_HIDDEN
                            + (N_LAYERS - 1) * D_HIDDEN * D_HIDDEN
                            + D_HIDDEN * D_OUT)
    transcend = padded_n * (6 * MULTIRES_VIEW + D_OUT)
    nbytes = (sum(int(a.size) * a.dtype.itemsize for a in (pts, vd, nrm, feat))
              + sum(int(p.size) * p.dtype.itemsize for p in flat_params)
              + padded_n * D_OUT * 4)

    out_t = pl.pallas_call(
        render_mlp_kernel,
        out_shape=jax.ShapeDtypeStruct((D_OUT, padded_n), jnp.float32),
        grid_spec=pltpu.PrefetchScalarGridSpec(
            num_scalar_prefetch=0,
            grid=grid,
            in_specs=in_specs,
            out_specs=out_spec,
        ),
        compiler_params=pltpu.CompilerParams(dimension_semantics=("parallel",)),
        cost_estimate=pl.CostEstimate(flops=flops, transcendentals=transcend,
                                      bytes_accessed=nbytes),
    )(pts, vd, nrm, feat, *flat_params)

    out_t = out_t[:, :n] if padded_n != n else out_t
    return out_t.T                                          # back to (N, D_OUT)


# --------------------------- parameter init (glue) ---------------------------
def init_params(key):
    """Deterministic init with weight_norm semantics: W = g * V / ||V||_row (dim=0)."""
    dims = [D_IN + D_FEATURE + EMBED_CH - 3] + [D_HIDDEN] * N_LAYERS + [D_OUT]
    params = []
    for l in range(len(dims) - 1):
        key, kv, kg, kb = jax.random.split(key, 4)
        din, dout = dims[l], dims[l + 1]
        v = jax.random.normal(kv, (dout, din), jnp.float32) * 0.1       # PyTorch (out, in)
        g = jax.random.uniform(kg, (dout, 1), jnp.float32, 0.5, 1.5)
        b = jax.random.normal(kb, (dout,), jnp.float32) * 0.01
        w_eff = g * v / jnp.linalg.norm(v, axis=1, keepdims=True)       # weight_norm, dim=0
        params.append((w_eff.T, b.reshape(1, dout)))                    # stored (in, out)
    return params


# ----------------------------- pure-JAX reference ----------------------------
def reference_forward(points, normals, view_dirs, feature_vectors, params):
    vd_emb = frequency_embed(view_dirs, MULTIRES_VIEW)
    x = jnp.concatenate([points * SCALE, vd_emb, normals, feature_vectors], axis=-1)
    n_lin = len(params)
    for l, (w, b) in enumerate(params):
        x = x @ w + b
        if l < n_lin - 1:
            x = jnp.maximum(x, 0.0)
    if SQUEEZE_OUT:
        x = jax.nn.sigmoid(x)
    return x


# ---------------------------------- main -------------------------------------
if __name__ == "__main__":
    key = jax.random.PRNGKey(0)
    k_pts, k_nrm, k_dir, k_feat, k_params = jax.random.split(key, 5)

    points = jax.random.normal(k_pts, (N_RAYS, 3), jnp.float32)
    normals = jax.random.normal(k_nrm, (N_RAYS, 3), jnp.float32)
    view_dirs = jax.random.normal(k_dir, (N_RAYS, 3), jnp.float32)
    view_dirs = view_dirs / (jnp.linalg.norm(view_dirs, axis=-1, keepdims=True) + 1e-6)
    feature_vectors = jax.random.normal(k_feat, (N_RAYS, D_FEATURE), jnp.float32)

    params = init_params(k_params)
    ref = reference_forward(points, normals, view_dirs, feature_vectors, params)

    # Exact-semantics f32 path.
    out = rendering_network_forward(points, normals, view_dirs, feature_vectors, params)
    out = jax.block_until_ready(out)
    assert out.shape == (N_RAYS, D_OUT)
    assert jnp.allclose(out, ref, atol=1e-4, rtol=1e-4)

    # bf16 streaming path (halves HBM input/weight bytes on v6e/v7x; f32 math in-kernel).
    out_bf16 = rendering_network_forward(points, normals, view_dirs, feature_vectors,
                                         params, compute_dtype=jnp.bfloat16)
    out_bf16 = jax.block_until_ready(out_bf16)
    assert out_bf16.shape == (N_RAYS, D_OUT)
    assert float(jnp.max(jnp.abs(out_bf16 - ref))) < 5e-2

    # Ragged-N path (exercises padding + slicing).
    m = 200
    out_ragged = rendering_network_forward(points[:m], normals[:m], view_dirs[:m],
                                           feature_vectors[:m], params)
    out_ragged = jax.block_until_ready(out_ragged)
    assert out_ragged.shape == (m, D_OUT)
    assert jnp.allclose(out_ragged, ref[:m], atol=1e-4, rtol=1e-4)

    print("KERNEL_OK")
</pallas_src>

<mosaic_0001>
module attributes {stable_mosaic.version = 11 : i64} {
  func.func @render_mlp_kernel(%arg0: i32, %arg1: memref<3x128xf32, #tpu.memory_space<vmem>>, %arg2: memref<3x128xf32, #tpu.memory_space<vmem>>, %arg3: memref<3x128xf32, #tpu.memory_space<vmem>>, %arg4: memref<16x128xf32, #tpu.memory_space<vmem>>, %arg5: memref<32x3xf32, #tpu.memory_space<vmem>>, %arg6: memref<32x3xf32, #tpu.memory_space<vmem>>, %arg7: memref<32x3xf32, #tpu.memory_space<vmem>>, %arg8: memref<32x3xf32, #tpu.memory_space<vmem>>, %arg9: memref<32x3xf32, #tpu.memory_space<vmem>>, %arg10: memref<32x3xf32, #tpu.memory_space<vmem>>, %arg11: memref<32x3xf32, #tpu.memory_space<vmem>>, %arg12: memref<32x3xf32, #tpu.memory_space<vmem>>, %arg13: memref<32x3xf32, #tpu.memory_space<vmem>>, %arg14: memref<32x3xf32, #tpu.memory_space<vmem>>, %arg15: memref<32x3xf32, #tpu.memory_space<vmem>>, %arg16: memref<32x16xf32, #tpu.memory_space<vmem>>, %arg17: memref<32x1xf32, #tpu.memory_space<vmem>>, %arg18: memref<32x32xf32, #tpu.memory_space<vmem>>, %arg19: memref<32x1xf32, #tpu.memory_space<vmem>>, %arg20: memref<3x32xf32, #tpu.memory_space<vmem>>, %arg21: memref<3x1xf32, #tpu.memory_space<vmem>>, %arg22: memref<3x128xf32, #tpu.memory_space<vmem>>) attributes {dimension_semantics = [#tpu.dimension_semantics<parallel>], iteration_bounds = array<i64: 2>, scalar_prefetch = 0 : i64, scratch_operands = 0 : i64, tpu.core_type = #tpu.core_type<tc>, window_params = [{transform_indices = @transform_0, window_bounds = array<i64: 3, 128>}, {transform_indices = @transform_1, window_bounds = array<i64: 3, 128>}, {transform_indices = @transform_2, window_bounds = array<i64: 3, 128>}, {transform_indices = @transform_3, window_bounds = array<i64: 16, 128>}, {pipeline_mode = #tpu.pipeline_mode<synchronous>, transform_indices = @transform_4, window_bounds = array<i64: 32, 3>}, {pipeline_mode = #tpu.pipeline_mode<synchronous>, transform_indices = @transform_5, window_bounds = array<i64: 32, 3>}, {pipeline_mode = #tpu.pipeline_mode<synchronous>, transform_indices = @transform_6, window_bounds = array<i64: 32, 3>}, {pipeline_mode = #tpu.pipeline_mode<synchronous>, transform_indices = @transform_7, window_bounds = array<i64: 32, 3>}, {pipeline_mode = #tpu.pipeline_mode<synchronous>, transform_indices = @transform_8, window_bounds = array<i64: 32, 3>}, {pipeline_mode = #tpu.pipeline_mode<synchronous>, transform_indices = @transform_9, window_bounds = array<i64: 32, 3>}, {pipeline_mode = #tpu.pipeline_mode<synchronous>, transform_indices = @transform_10, window_bounds = array<i64: 32, 3>}, {pipeline_mode = #tpu.pipeline_mode<synchronous>, transform_indices = @transform_11, window_bounds = array<i64: 32, 3>}, {pipeline_mode = #tpu.pipeline_mode<synchronous>, transform_indices = @transform_12, window_bounds = array<i64: 32, 3>}, {pipeline_mode = #tpu.pipeline_mode<synchronous>, transform_indices = @transform_13, window_bounds = array<i64: 32, 3>}, {pipeline_mode = #tpu.pipeline_mode<synchronous>, transform_indices = @transform_14, window_bounds = array<i64: 32, 3>}, {pipeline_mode = #tpu.pipeline_mode<synchronous>, transform_indices = @transform_15, window_bounds = array<i64: 32, 16>}, {pipeline_mode = #tpu.pipeline_mode<synchronous>, transform_indices = @transform_16, window_bounds = array<i64: 32, 1>}, {pipeline_mode = #tpu.pipeline_mode<synchronous>, transform_indices = @transform_17, window_bounds = array<i64: 32, 32>}, {pipeline_mode = #tpu.pipeline_mode<synchronous>, transform_indices = @transform_18, window_bounds = array<i64: 32, 1>}, {pipeline_mode = #tpu.pipeline_mode<synchronous>, transform_indices = @transform_19, window_bounds = array<i64: 3, 32>}, {pipeline_mode = #tpu.pipeline_mode<synchronous>, transform_indices = @transform_20, window_bounds = array<i64: 3, 1>}, {transform_indices = @transform_21, window_bounds = array<i64: 3, 128>}]} {
    %c0 = arith.constant 0 : index
    %c0_0 = arith.constant 0 : index
    %0 = vector.load %arg1[%c0, %c0_0] : memref<3x128xf32, #tpu.memory_space<vmem>>, vector<3x128xf32>
    %cst = arith.constant 1.000000e+00 : f32
    %1 = vector.broadcast %cst : f32 to vector<3x128xf32>
    %2 = arith.mulf %0, %1 : vector<3x128xf32>
    %c0_1 = arith.constant 0 : index
    %c0_2 = arith.constant 0 : index
    %3 = vector.load %arg2[%c0_1, %c0_2] : memref<3x128xf32, #tpu.memory_space<vmem>>, vector<3x128xf32>
    %c0_3 = arith.constant 0 : index
    %c0_4 = arith.constant 0 : index
    %4 = vector.load %arg3[%c0_3, %c0_4] : memref<3x128xf32, #tpu.memory_space<vmem>>, vector<3x128xf32>
    %c0_5 = arith.constant 0 : index
    %c0_6 = arith.constant 0 : index
    %5 = vector.load %arg4[%c0_5, %c0_6] : memref<16x128xf32, #tpu.memory_space<vmem>>, vector<16x128xf32>
    %c0_7 = arith.constant 0 : index
    %c0_8 = arith.constant 0 : index
    %6 = vector.load %arg5[%c0_7, %c0_8] : memref<32x3xf32, #tpu.memory_space<vmem>>, vector<32x3xf32>
    %cst_9 = arith.constant dense<0.000000e+00> : vector<32x128xf32>
    %7 = tpu.matmul %6, %2, %cst_9 {dimension_numbers = #tpu.dot_dimension_numbers<[1], [0], [0], [1], [0, 0, 1, 1], [], []>} : vector<32x3xf32>, vector<3x128xf32>, vector<32x128xf32> -> vector<32x128xf32>
    %c0_10 = arith.constant 0 : index
    %c0_11 = arith.constant 0 : index
    %8 = vector.load %arg6[%c0_10, %c0_11] : memref<32x3xf32, #tpu.memory_space<vmem>>, vector<32x3xf32>
    %cst_12 = arith.constant dense<0.000000e+00> : vector<32x128xf32>
    %9 = tpu.matmul %8, %3, %cst_12 {dimension_numbers = #tpu.dot_dimension_numbers<[1], [0], [0], [1], [0, 0, 1, 1], [], []>} : vector<32x3xf32>, vector<3x128xf32>, vector<32x128xf32> -> vector<32x128xf32>
    %10 = arith.addf %7, %9 : vector<32x128xf32>
    %c0_13 = arith.constant 0 : index
    %c0_14 = arith.constant 0 : index
    %11 = vector.load %arg7[%c0_13, %c0_14] : memref<32x3xf32, #tpu.memory_space<vmem>>, vector<32x3xf32>
    %cst_15 = arith.constant 1.000000e+00 : f32
    %12 = vector.broadcast %cst_15 : f32 to vector<3x128xf32>
    %13 = arith.mulf %3, %12 : vector<3x128xf32>
    %14 = math.sin %13 : vector<3x128xf32>
    %cst_16 = arith.constant dense<0.000000e+00> : vector<32x128xf32>
    %15 = tpu.matmul %11, %14, %cst_16 {dimension_numbers = #tpu.dot_dimension_numbers<[1], [0], [0], [1], [0, 0, 1, 1], [], []>} : vector<32x3xf32>, vector<3x128xf32>, vector<32x128xf32> -> vector<32x128xf32>
    %16 = arith.addf %10, %15 : vector<32x128xf32>
    %c0_17 = arith.constant 0 : index
    %c0_18 = arith.constant 0 : index
    %17 = vector.load %arg8[%c0_17, %c0_18] : memref<32x3xf32, #tpu.memory_space<vmem>>, vector<32x3xf32>
    %cst_19 = arith.constant 1.000000e+00 : f32
    %18 = vector.broadcast %cst_19 : f32 to vector<3x128xf32>
    %19 = arith.mulf %3, %18 : vector<3x128xf32>
    %20 = math.cos %19 : vector<3x128xf32>
    %cst_20 = arith.constant dense<0.000000e+00> : vector<32x128xf32>
    %21 = tpu.matmul %17, %20, %cst_20 {dimension_numbers = #tpu.dot_dimension_numbers<[1], [0], [0], [1], [0, 0, 1, 1], [], []>} : vector<32x3xf32>, vector<3x128xf32>, vector<32x128xf32> -> vector<32x128xf32>
    %22 = arith.addf %16, %21 : vector<32x128xf32>
    %c0_21 = arith.constant 0 : index
    %c0_22 = arith.constant 0 : index
    %23 = vector.load %arg9[%c0_21, %c0_22] : memref<32x3xf32, #tpu.memory_space<vmem>>, vector<32x3xf32>
    %cst_23 = arith.constant 2.000000e+00 : f32
    %24 = vector.broadcast %cst_23 : f32 to vector<3x128xf32>
    %25 = arith.mulf %3, %24 : vector<3x128xf32>
    %26 = math.sin %25 : vector<3x128xf32>
    %cst_24 = arith.constant dense<0.000000e+00> : vector<32x128xf32>
    %27 = tpu.matmul %23, %26, %cst_24 {dimension_numbers = #tpu.dot_dimension_numbers<[1], [0], [0], [1], [0, 0, 1, 1], [], []>} : vector<32x3xf32>, vector<3x128xf32>, vector<32x128xf32> -> vector<32x128xf32>
    %28 = arith.addf %22, %27 : vector<32x128xf32>
    %c0_25 = arith.constant 0 : index
    %c0_26 = arith.constant 0 : index
    %29 = vector.load %arg10[%c0_25, %c0_26] : memref<32x3xf32, #tpu.memory_space<vmem>>, vector<32x3xf32>
    %cst_27 = arith.constant 2.000000e+00 : f32
    %30 = vector.broadcast %cst_27 : f32 to vector<3x128xf32>
    %31 = arith.mulf %3, %30 : vector<3x128xf32>
    %32 = math.cos %31 : vector<3x128xf32>
    %cst_28 = arith.constant dense<0.000000e+00> : vector<32x128xf32>
    %33 = tpu.matmul %29, %32, %cst_28 {dimension_numbers = #tpu.dot_dimension_numbers<[1], [0], [0], [1], [0, 0, 1, 1], [], []>} : vector<32x3xf32>, vector<3x128xf32>, vector<32x128xf32> -> vector<32x128xf32>
    %34 = arith.addf %28, %33 : vector<32x128xf32>
    %c0_29 = arith.constant 0 : index
    %c0_30 = arith.constant 0 : index
    %35 = vector.load %arg11[%c0_29, %c0_30] : memref<32x3xf32, #tpu.memory_space<vmem>>, vector<32x3xf32>
    %cst_31 = arith.constant 4.000000e+00 : f32
    %36 = vector.broadcast %cst_31 : f32 to vector<3x128xf32>
    %37 = arith.mulf %3, %36 : vector<3x128xf32>
    %38 = math.sin %37 : vector<3x128xf32>
    %cst_32 = arith.constant dense<0.000000e+00> : vector<32x128xf32>
    %39 = tpu.matmul %35, %38, %cst_32 {dimension_numbers = #tpu.dot_dimension_numbers<[1], [0], [0], [1], [0, 0, 1, 1], [], []>} : vector<32x3xf32>, vector<3x128xf32>, vector<32x128xf32> -> vector<32x128xf32>
    %40 = arith.addf %34, %39 : vector<32x128xf32>
    %c0_33 = arith.constant 0 : index
    %c0_34 = arith.constant 0 : index
    %41 = vector.load %arg12[%c0_33, %c0_34] : memref<32x3xf32, #tpu.memory_space<vmem>>, vector<32x3xf32>
    %cst_35 = arith.constant 4.000000e+00 : f32
    %42 = vector.broadcast %cst_35 : f32 to vector<3x128xf32>
    %43 = arith.mulf %3, %42 : vector<3x128xf32>
    %44 = math.cos %43 : vector<3x128xf32>
    %cst_36 = arith.constant dense<0.000000e+00> : vector<32x128xf32>
    %45 = tpu.matmul %41, %44, %cst_36 {dimension_numbers = #tpu.dot_dimension_numbers<[1], [0], [0], [1], [0, 0, 1, 1], [], []>} : vector<32x3xf32>, vector<3x128xf32>, vector<32x128xf32> -> vector<32x128xf32>
    %46 = arith.addf %40, %45 : vector<32x128xf32>
    %c0_37 = arith.constant 0 : index
    %c0_38 = arith.constant 0 : index
    %47 = vector.load %arg13[%c0_37, %c0_38] : memref<32x3xf32, #tpu.memory_space<vmem>>, vector<32x3xf32>
    %cst_39 = arith.constant 8.000000e+00 : f32
    %48 = vector.broadcast %cst_39 : f32 to vector<3x128xf32>
    %49 = arith.mulf %3, %48 : vector<3x128xf32>
    %50 = math.sin %49 : vector<3x128xf32>
    %cst_40 = arith.constant dense<0.000000e+00> : vector<32x128xf32>
    %51 = tpu.matmul %47, %50, %cst_40 {dimension_numbers = #tpu.dot_dimension_numbers<[1], [0], [0], [1], [0, 0, 1, 1], [], []>} : vector<32x3xf32>, vector<3x128xf32>, vector<32x128xf32> -> vector<32x128xf32>
    %52 = arith.addf %46, %51 : vector<32x128xf32>
    %c0_41 = arith.constant 0 : index
    %c0_42 = arith.constant 0 : index
    %53 = vector.load %arg14[%c0_41, %c0_42] : memref<32x3xf32, #tpu.memory_space<vmem>>, vector<32x3xf32>
    %cst_43 = arith.constant 8.000000e+00 : f32
    %54 = vector.broadcast %cst_43 : f32 to vector<3x128xf32>
    %55 = arith.mulf %3, %54 : vector<3x128xf32>
    %56 = math.cos %55 : vector<3x128xf32>
    %cst_44 = arith.constant dense<0.000000e+00> : vector<32x128xf32>
    %57 = tpu.matmul %53, %56, %cst_44 {dimension_numbers = #tpu.dot_dimension_numbers<[1], [0], [0], [1], [0, 0, 1, 1], [], []>} : vector<32x3xf32>, vector<3x128xf32>, vector<32x128xf32> -> vector<32x128xf32>
    %58 = arith.addf %52, %57 : vector<32x128xf32>
    %c0_45 = arith.constant 0 : index
    %c0_46 = arith.constant 0 : index
    %59 = vector.load %arg15[%c0_45, %c0_46] : memref<32x3xf32, #tpu.memory_space<vmem>>, vector<32x3xf32>
    %cst_47 = arith.constant dense<0.000000e+00> : vector<32x128xf32>
    %60 = tpu.matmul %59, %4, %cst_47 {dimension_numbers = #tpu.dot_dimension_numbers<[1], [0], [0], [1], [0, 0, 1, 1], [], []>} : vector<32x3xf32>, vector<3x128xf32>, vector<32x128xf32> -> vector<32x128xf32>
    %61 = arith.addf %58, %60 : vector<32x128xf32>
    %c0_48 = arith.constant 0 : index
    %c0_49 = arith.constant 0 : index
    %62 = vector.load %arg16[%c0_48, %c0_49] : memref<32x16xf32, #tpu.memory_space<vmem>>, vector<32x16xf32>
    %cst_50 = arith.constant dense<0.000000e+00> : vector<32x128xf32>
    %63 = tpu.matmul %62, %5, %cst_50 {dimension_numbers = #tpu.dot_dimension_numbers<[1], [0], [0], [1], [0, 0, 1, 1], [], []>} : vector<32x16xf32>, vector<16x128xf32>, vector<32x128xf32> -> vector<32x128xf32>
    %64 = arith.addf %61, %63 : vector<32x128xf32>
    %c0_51 = arith.constant 0 : index
    %c0_52 = arith.constant 0 : index
    %65 = vector.load %arg17[%c0_51, %c0_52] : memref<32x1xf32, #tpu.memory_space<vmem>>, vector<32x1xf32>
    %66 = vector.broadcast %65 : vector<32x1xf32> to vector<32x128xf32>
    %67 = arith.addf %64, %66 : vector<32x128xf32>
    %cst_53 = arith.constant 0.000000e+00 : f32
    %68 = vector.broadcast %cst_53 : f32 to vector<32x128xf32>
    %69 = arith.maximumf %67, %68 : vector<32x128xf32>
    %c0_54 = arith.constant 0 : index
    %c0_55 = arith.constant 0 : index
    %70 = vector.load %arg18[%c0_54, %c0_55] : memref<32x32xf32, #tpu.memory_space<vmem>>, vector<32x32xf32>
    %c0_56 = arith.constant 0 : index
    %c0_57 = arith.constant 0 : index
    %71 = vector.load %arg19[%c0_56, %c0_57] : memref<32x1xf32, #tpu.memory_space<vmem>>, vector<32x1xf32>
    %cst_58 = arith.constant dense<0.000000e+00> : vector<32x128xf32>
    %72 = tpu.matmul %70, %69, %cst_58 {dimension_numbers = #tpu.dot_dimension_numbers<[1], [0], [0], [1], [0, 0, 1, 1], [], []>} : vector<32x32xf32>, vector<32x128xf32>, vector<32x128xf32> -> vector<32x128xf32>
    %73 = vector.broadcast %71 : vector<32x1xf32> to vector<32x128xf32>
    %74 = arith.addf %72, %73 : vector<32x128xf32>
    %cst_59 = arith.constant 0.000000e+00 : f32
    %75 = vector.broadcast %cst_59 : f32 to vector<32x128xf32>
    %76 = arith.maximumf %74, %75 : vector<32x128xf32>
    %c0_60 = arith.constant 0 : index
    %c0_61 = arith.constant 0 : index
    %77 = vector.load %arg20[%c0_60, %c0_61] : memref<3x32xf32, #tpu.memory_space<vmem>>, vector<3x32xf32>
    %c0_62 = arith.constant 0 : index
    %c0_63 = arith.constant 0 : index
    %78 = vector.load %arg21[%c0_62, %c0_63] : memref<3x1xf32, #tpu.memory_space<vmem>>, vector<3x1xf32>
    %cst_64 = arith.constant dense<0.000000e+00> : vector<3x128xf32>
    %79 = tpu.matmul %77, %76, %cst_64 {dimension_numbers = #tpu.dot_dimension_numbers<[1], [0], [0], [1], [0, 0, 1, 1], [], []>} : vector<3x32xf32>, vector<32x128xf32>, vector<3x128xf32> -> vector<3x128xf32>
    %80 = vector.broadcast %78 : vector<3x1xf32> to vector<3x128xf32>
    %81 = arith.addf %79, %80 : vector<3x128xf32>
    %82 = math.absf %81 : vector<3x128xf32>
    %cst_65 = arith.constant 0.000000e+00 : f32
    %83 = vector.broadcast %cst_65 : f32 to vector<3x128xf32>
    %84 = arith.subf %83, %82 : vector<3x128xf32>
    %85 = math.exp %84 : vector<3x128xf32>
    %cst_66 = arith.constant 0.000000e+00 : f32
    %86 = vector.broadcast %cst_66 : f32 to vector<3x128xf32>
    %87 = arith.cmpf oge, %81, %86 : vector<3x128xf32>
    %cst_67 = arith.constant 1.000000e+00 : f32
    %88 = vector.broadcast %cst_67 : f32 to vector<3x128xf32>
    %89 = arith.addf %88, %85 : vector<3x128xf32>
    %cst_68 = arith.constant 1.000000e+00 : f32
    %90 = vector.broadcast %cst_68 : f32 to vector<3x128xf32>
    %91 = arith.divf %90, %89 : vector<3x128xf32>
    %cst_69 = arith.constant 1.000000e+00 : f32
    %92 = vector.broadcast %cst_69 : f32 to vector<3x128xf32>
    %93 = arith.addf %92, %85 : vector<3x128xf32>
    %94 = arith.divf %85, %93 : vector<3x128xf32>
    %95 = arith.select %87, %91, %94 : vector<3x128xi1>, vector<3x128xf32>
    %c0_70 = arith.constant 0 : index
    %c0_71 = arith.constant 0 : index
    %96 = vector.load %arg22[%c0_70, %c0_71] : memref<3x128xf32, #tpu.memory_space<vmem>>, vector<3x128xf32>
    tpu.vector_store %arg22[%c0_70, %c0_71], %95 {strides = array<i32>} : memref<3x128xf32, #tpu.memory_space<vmem>>, vector<3x128xf32>,
    return
  }
  func.func @transform_0(%arg0: i32) -> (i32, i32) {
    %c0_i32 = arith.constant 0 : i32
    %c0_i32_0 = arith.constant 0 : i32
    return %c0_i32, %arg0 : i32, i32
  }
  func.func @transform_1(%arg0: i32) -> (i32, i32) {
    %c0_i32 = arith.constant 0 : i32
    %c0_i32_0 = arith.constant 0 : i32
    return %c0_i32, %arg0 : i32, i32
  }
  func.func @transform_2(%arg0: i32) -> (i32, i32) {
    %c0_i32 = arith.constant 0 : i32
    %c0_i32_0 = arith.constant 0 : i32
    return %c0_i32, %arg0 : i32, i32
  }
  func.func @transform_3(%arg0: i32) -> (i32, i32) {
    %c0_i32 = arith.constant 0 : i32
    %c0_i32_0 = arith.constant 0 : i32
    return %c0_i32, %arg0 : i32, i32
  }
  func.func @transform_4(%arg0: i32) -> (i32, i32) {
    %c0_i32 = arith.constant 0 : i32
    %c0_i32_0 = arith.constant 0 : i32
    %c0_i32_1 = arith.constant 0 : i32
    return %c0_i32, %c0_i32_0 : i32, i32
  }
  func.func @transform_5(%arg0: i32) -> (i32, i32) {
    %c0_i32 = arith.constant 0 : i32
    %c0_i32_0 = arith.constant 0 : i32
    %c0_i32_1 = arith.constant 0 : i32
    return %c0_i32, %c0_i32_0 : i32, i32
  }
  func.func @transform_6(%arg0: i32) -> (i32, i32) {
    %c0_i32 = arith.constant 0 : i32
    %c0_i32_0 = arith.constant 0 : i32
    %c0_i32_1 = arith.constant 0 : i32
    return %c0_i32, %c0_i32_0 : i32, i32
  }
  func.func @transform_7(%arg0: i32) -> (i32, i32) {
    %c0_i32 = arith.constant 0 : i32
    %c0_i32_0 = arith.constant 0 : i32
    %c0_i32_1 = arith.constant 0 : i32
    return %c0_i32, %c0_i32_0 : i32, i32
  }
  func.func @transform_8(%arg0: i32) -> (i32, i32) {
    %c0_i32 = arith.constant 0 : i32
    %c0_i32_0 = arith.constant 0 : i32
    %c0_i32_1 = arith.constant 0 : i32
    return %c0_i32, %c0_i32_0 : i32, i32
  }
  func.func @transform_9(%arg0: i32) -> (i32, i32) {
    %c0_i32 = arith.constant 0 : i32
    %c0_i32_0 = arith.constant 0 : i32
    %c0_i32_1 = arith.constant 0 : i32
    return %c0_i32, %c0_i32_0 : i32, i32
  }
  func.func @transform_10(%arg0: i32) -> (i32, i32) {
    %c0_i32 = arith.constant 0 : i32
    %c0_i32_0 = arith.constant 0 : i32
    %c0_i32_1 = arith.constant 0 : i32
    return %c0_i32, %c0_i32_0 : i32, i32
  }
  func.func @transform_11(%arg0: i32) -> (i32, i32) {
    %c0_i32 = arith.constant 0 : i32
    %c0_i32_0 = arith.constant 0 : i32
    %c0_i32_1 = arith.constant 0 : i32
    return %c0_i32, %c0_i32_0 : i32, i32
  }
  func.func @transform_12(%arg0: i32) -> (i32, i32) {
    %c0_i32 = arith.constant 0 : i32
    %c0_i32_0 = arith.constant 0 : i32
    %c0_i32_1 = arith.constant 0 : i32
    return %c0_i32, %c0_i32_0 : i32, i32
  }
  func.func @transform_13(%arg0: i32) -> (i32, i32) {
    %c0_i32 = arith.constant 0 : i32
    %c0_i32_0 = arith.constant 0 : i32
    %c0_i32_1 = arith.constant 0 : i32
    return %c0_i32, %c0_i32_0 : i32, i32
  }
  func.func @transform_14(%arg0: i32) -> (i32, i32) {
    %c0_i32 = arith.constant 0 : i32
    %c0_i32_0 = arith.constant 0 : i32
    %c0_i32_1 = arith.constant 0 : i32
    return %c0_i32, %c0_i32_0 : i32, i32
  }
  func.func @transform_15(%arg0: i32) -> (i32, i32) {
    %c0_i32 = arith.constant 0 : i32
    %c0_i32_0 = arith.constant 0 : i32
    %c0_i32_1 = arith.constant 0 : i32
    return %c0_i32, %c0_i32_0 : i32, i32
  }
  func.func @transform_16(%arg0: i32) -> (i32, i32) {
    %c0_i32 = arith.constant 0 : i32
    %c0_i32_0 = arith.constant 0 : i32
    %c0_i32_1 = arith.constant 0 : i32
    return %c0_i32, %c0_i32_0 : i32, i32
  }
  func.func @transform_17(%arg0: i32) -> (i32, i32) {
    %c0_i32 = arith.constant 0 : i32
    %c0_i32_0 = arith.constant 0 : i32
    %c0_i32_1 = arith.constant 0 : i32
    return %c0_i32, %c0_i32_0 : i32, i32
  }
  func.func @transform_18(%arg0: i32) -> (i32, i32) {
    %c0_i32 = arith.constant 0 : i32
    %c0_i32_0 = arith.constant 0 : i32
    %c0_i32_1 = arith.constant 0 : i32
    return %c0_i32, %c0_i32_0 : i32, i32
  }
  func.func @transform_19(%arg0: i32) -> (i32, i32) {
    %c0_i32 = arith.constant 0 : i32
    %c0_i32_0 = arith.constant 0 : i32
    %c0_i32_1 = arith.constant 0 : i32
    return %c0_i32, %c0_i32_0 : i32, i32
  }
  func.func @transform_20(%arg0: i32) -> (i32, i32) {
    %c0_i32 = arith.constant 0 : i32
    %c0_i32_0 = arith.constant 0 : i32
    %c0_i32_1 = arith.constant 0 : i32
    return %c0_i32, %c0_i32_0 : i32, i32
  }
  func.func @transform_21(%arg0: i32) -> (i32, i32) {
    %c0_i32 = arith.constant 0 : i32
    %c0_i32_0 = arith.constant 0 : i32
    return %c0_i32, %arg0 : i32, i32
  }
}

</mosaic_0001>

<llo_original>
// kernel: tpu_custom_call.1
$region0: #{tpu_custom_call.1}
  #allocation0 [shape = 'u32[]', space=smem, size = 0x4, offset = 0x4, fixed_abs, tag = 'smem constant byte address 0x4 - core index']
  #allocation1 [shape = 'u32[72,128]{1,0:T(1,128)}', space=vmem, size = 0x9000, scoped, tag = 'internal scratch']
  %s0 = inlined_call_operand.vmem [shape: f32[3,256], index: 0, kind: input, shape index: {}]
  %s1 = inlined_call_operand.vmem [shape: f32[3,256], index: 1, kind: input, shape index: {}]
  %s2 = inlined_call_operand.vmem [shape: f32[3,256], index: 2, kind: input, shape index: {}]
  %s3 = inlined_call_operand.vmem [shape: f32[16,256], index: 3, kind: input, shape index: {}]
  %s4 = inlined_call_operand.vmem [shape: f32[32,3], index: 4, kind: input, shape index: {}]
  %s5 = inlined_call_operand.vmem [shape: f32[32,3], index: 5, kind: input, shape index: {}]
  %s6 = inlined_call_operand.vmem [shape: f32[32,3], index: 6, kind: input, shape index: {}]
  %s7 = inlined_call_operand.vmem [shape: f32[32,3], index: 7, kind: input, shape index: {}]
  %s8 = inlined_call_operand.vmem [shape: f32[32,3], index: 8, kind: input, shape index: {}]
  %s9 = inlined_call_operand.vmem [shape: f32[32,3], index: 9, kind: input, shape index: {}]
  %s10 = inlined_call_operand.vmem [shape: f32[32,3], index: 10, kind: input, shape index: {}]
  %s11 = inlined_call_operand.vmem [shape: f32[32,3], index: 11, kind: input, shape index: {}]
  %s12 = inlined_call_operand.vmem [shape: f32[32,3], index: 12, kind: input, shape index: {}]
  %s13 = inlined_call_operand.vmem [shape: f32[32,3], index: 13, kind: input, shape index: {}]
  %s14 = inlined_call_operand.vmem [shape: f32[32,3], index: 14, kind: input, shape index: {}]
  %s15 = inlined_call_operand.vmem [shape: f32[32,16], index: 15, kind: input, shape index: {}]
  %s16 = inlined_call_operand.vmem [shape: f32[32,1], index: 16, kind: input, shape index: {}]
  %s17 = inlined_call_operand.vmem [shape: f32[32,32], index: 17, kind: input, shape index: {}]
  %s18 = inlined_call_operand.vmem [shape: f32[32,1], index: 18, kind: input, shape index: {}]
  %s19 = inlined_call_operand.vmem [shape: f32[3,32], index: 19, kind: input, shape index: {}]
  %s20 = inlined_call_operand.vmem [shape: f32[3,1], index: 20, kind: input, shape index: {}]
  %s21 = inlined_call_operand.hbm [shape: f32[3,256], index: 21, kind: output, shape index: {}]
  %s22 = sld [smem:[#allocation0]]
  $region155: #{tpu_custom_call.1} parent=0
    _
  %s24 = ssub.s32 1, %s22
  %s25 = scalar_select 0, %s24, %s22
  $region1: #{tpu_custom_call.1} parent=0
    #allocation2 [shape = 'u8[16384]{0}', space=vmem, size = 0x4000, scoped, tag = 'input window, operand 3']
    #allocation3 [shape = 'u8[4096]{0}', space=vmem, size = 0x1000, scoped, tag = 'output window, operand 0']
    #allocation4 [shape = 's32[2]{0}', space=sflag, size = 0x8, scoped, tag = 'scoped memory for tpu_custom_call.1']
    %26 = vsyncpa [#allocation4], 0
    %s27 = scalar_lea.sflag [#allocation4], 1
    %28 = vsyncpa %s27, 0
    loop: start=0, step=1, limit=4
    $region2: #{tpu_custom_call.1} parent=1 // loop_pre_header
      _
    $region3: #{tpu_custom_call.1} parent=1 // loop_header
      %s30 = sphi 0, %s34
      %p31 = scmp.ge.s32.totalorder %s30, 4
      %s40 = sphi 0, %s42
      %s43 = sphi 0, %s40
      %s44 = sphi 0, %s43
      %s60 = sphi 0, %s44
      %s66 = sphi 0, %s68
      %s69 = sphi 0, %s66
      %s70 = sphi 0, %s69
      %s86 = sphi 0, %s70
      %s92 = sphi 0, %s94
      %s95 = sphi 0, %s92
      %s96 = sphi 0, %s95
      %s112 = sphi 0, %s96
      %s118 = sphi 0, %s120
      %s121 = sphi 0, %s118
      %s122 = sphi 0, %s121
      %s138 = sphi 0, %s122
      %s142 = sphi 0, %s142
      %s144 = sphi 0, %s142
      %s145 = sphi 0, %s144
      %s159 = sphi 0, %s145
      %s163 = sphi 0, %s163
      %s165 = sphi 0, %s163
      %s166 = sphi 0, %s165
      %s180 = sphi 0, %s166
      %s184 = sphi 0, %s184
      %s186 = sphi 0, %s184
      %s187 = sphi 0, %s186
      %s201 = sphi 0, %s187
      %s205 = sphi 0, %s205
      %s207 = sphi 0, %s205
      %s208 = sphi 0, %s207
      %s222 = sphi 0, %s208
      %s226 = sphi 0, %s226
      %s228 = sphi 0, %s226
      %s229 = sphi 0, %s228
      %s243 = sphi 0, %s229
      %s247 = sphi 0, %s247
      %s249 = sphi 0, %s247
      %s250 = sphi 0, %s249
      %s264 = sphi 0, %s250
      %s268 = sphi 0, %s268
      %s270 = sphi 0, %s268
      %s271 = sphi 0, %s270
      %s285 = sphi 0, %s271
      %s289 = sphi 0, %s289
      %s291 = sphi 0, %s289
      %s292 = sphi 0, %s291
      %s306 = sphi 0, %s292
      %s310 = sphi 0, %s310
      %s312 = sphi 0, %s310
      %s313 = sphi 0, %s312
      %s327 = sphi 0, %s313
      %s331 = sphi 0, %s331
      %s333 = sphi 0, %s331
      %s334 = sphi 0, %s333
      %s348 = sphi 0, %s334
      %s352 = sphi 0, %s352
      %s354 = sphi 0, %s352
      %s355 = sphi 0, %s354
      %s369 = sphi 0, %s355
      %s373 = sphi 0, %s373
      %s375 = sphi 0, %s373
      %s376 = sphi 0, %s375
      %s390 = sphi 0, %s376
      %s394 = sphi 0, %s394
      %s396 = sphi 0, %s394
      %s397 = sphi 0, %s396
      %s411 = sphi 0, %s397
      %s415 = sphi 0, %s415
      %s417 = sphi 0, %s415
      %s418 = sphi 0, %s417
      %s432 = sphi 0, %s418
      %s436 = sphi 0, %s436
      %s438 = sphi 0, %s436
      %s439 = sphi 0, %s438
      %s453 = sphi 0, %s439
      %s457 = sphi 0, %s457
      %s459 = sphi 0, %s457
      %s460 = sphi 0, %s459
      %s474 = sphi 0, %s460
      %s478 = sphi 0, %s478
      %s480 = sphi 0, %s478
      %s481 = sphi 0, %s480
      %s495 = sphi 0, %s481
      %s501 = sphi 0, %s503
      %s504 = sphi 0, %s501
      %s505 = sphi 0, %s504
      %s521 = sphi 0, %s505
    $region4: #{tpu_custom_call.1} parent=1 // loop_header_branch
      %33 = sbr.rel (%p31) target = $region8
    $region5: #{tpu_custom_call.1} parent=1 // loop_body
      %s35 = ssub.s32 %s30, 1
      %s36 = ssub.s32 %s30, 2
      %s37 = sadd.s32 %s30, 1
      %s38 = ssub.s32 %s30, %s37
      %p39 = scmp.eq.s32.totalorder %s38, 0
      %s41 = sadd.s32 %s40, 1
      %s42 = scalar_select %p39, %s40, %s41
      %p45 = pneg %p39
      %p46 = scmp.eq.s32.totalorder %s30, 1
      %p47 = por %p45, %p46
      %p48 = scmp.ne.s32.totalorder %s40, %s43
      %p49 = scmp.eq.s32.totalorder %s30, 0
      %p50 = por %p48, %p49
      %p51 = scmp.ne.s32.totalorder %s40, %s43
      %p52 = scmp.eq.s32.totalorder %s35, 1
      %p53 = por %p51, %p52
      %p54 = scmp.ne.s32.totalorder %s43, %s44
      %p55 = scmp.eq.s32.totalorder %s35, 0
      %p56 = por %p54, %p55
      %p57 = scmp.ne.s32.totalorder %s43, %s44
      %p58 = scmp.eq.s32.totalorder %s36, 1
      %p59 = por %p57, %p58
      %p61 = scmp.ne.s32.totalorder %s44, %s60
      %p62 = scmp.eq.s32.totalorder %s36, 0
      %p63 = por %p61, %p62
      %s64 = ssub.s32 %s30, %s37
      %p65 = scmp.eq.s32.totalorder %s64, 0
      %s67 = sadd.s32 %s66, 1
      %s68 = scalar_select %p65, %s66, %s67
      %p71 = pneg %p65
      %p72 = scmp.eq.s32.totalorder %s30, 1
      %p73 = por %p71, %p72
      %p74 = scmp.ne.s32.totalorder %s66, %s69
      %p75 = scmp.eq.s32.totalorder %s30, 0
      %p76 = por %p74, %p75
      %p77 = scmp.ne.s32.totalorder %s66, %s69
      %p78 = scmp.eq.s32.totalorder %s35, 1
      %p79 = por %p77, %p78
      %p80 = scmp.ne.s32.totalorder %s69, %s70
      %p81 = scmp.eq.s32.totalorder %s35, 0
      %p82 = por %p80, %p81
      %p83 = scmp.ne.s32.totalorder %s69, %s70
      %p84 = scmp.eq.s32.totalorder %s36, 1
      %p85 = por %p83, %p84
      %p87 = scmp.ne.s32.totalorder %s70, %s86
      %p88 = scmp.eq.s32.totalorder %s36, 0
      %p89 = por %p87, %p88
      %s90 = ssub.s32 %s30, %s37
      %p91 = scmp.eq.s32.totalorder %s90, 0
      %s93 = sadd.s32 %s92, 1
      %s94 = scalar_select %p91, %s92, %s93
      %p97 = pneg %p91
      %p98 = scmp.eq.s32.totalorder %s30, 1
      %p99 = por %p97, %p98
      %p100 = scmp.ne.s32.totalorder %s92, %s95
      %p101 = scmp.eq.s32.totalorder %s30, 0
      %p102 = por %p100, %p101
      %p103 = scmp.ne.s32.totalorder %s92, %s95
      %p104 = scmp.eq.s32.totalorder %s35, 1
      %p105 = por %p103, %p104
      %p106 = scmp.ne.s32.totalorder %s95, %s96
      %p107 = scmp.eq.s32.totalorder %s35, 0
      %p108 = por %p106, %p107
      %p109 = scmp.ne.s32.totalorder %s95, %s96
      %p110 = scmp.eq.s32.totalorder %s36, 1
      %p111 = por %p109, %p110
      %p113 = scmp.ne.s32.totalorder %s96, %s112
      %p114 = scmp.eq.s32.totalorder %s36, 0
      %p115 = por %p113, %p114
      %s116 = ssub.s32 %s30, %s37
      %p117 = scmp.eq.s32.totalorder %s116, 0
      %s119 = sadd.s32 %s118, 1
      %s120 = scalar_select %p117, %s118, %s119
      %p123 = pneg %p117
      %p124 = scmp.eq.s32.totalorder %s30, 1
      %p125 = por %p123, %p124
      %p126 = scmp.ne.s32.totalorder %s118, %s121
      %p127 = scmp.eq.s32.totalorder %s30, 0
      %p128 = por %p126, %p127
      %p129 = scmp.ne.s32.totalorder %s118, %s121
      %p130 = scmp.eq.s32.totalorder %s35, 1
      %p131 = por %p129, %p130
      %p132 = scmp.ne.s32.totalorder %s121, %s122
      %p133 = scmp.eq.s32.totalorder %s35, 0
      %p134 = por %p132, %p133
      %p135 = scmp.ne.s32.totalorder %s121, %s122
      %p136 = scmp.eq.s32.totalorder %s36, 1
      %p137 = por %p135, %p136
      %p139 = scmp.ne.s32.totalorder %s122, %s138
      %p140 = scmp.eq.s32.totalorder %s36, 0
      %p141 = por %p139, %p140
      %s143 = sadd.s32 %s142, 1
      %p146 = scmp.eq.s32.totalorder %s30, 1
      %p147 = scmp.ne.s32.totalorder %s142, %s144
      %p148 = scmp.eq.s32.totalorder %s30, 0
      %p149 = por %p147, %p148
      %p150 = scmp.ne.s32.totalorder %s142, %s144
      %p151 = scmp.eq.s32.totalorder %s35, 1
      %p152 = por %p150, %p151
      %p153 = scmp.ne.s32.totalorder %s144, %s145
      %p154 = scmp.eq.s32.totalorder %s35, 0
      %p155 = por %p153, %p154
      %p156 = scmp.ne.s32.totalorder %s144, %s145
      %p157 = scmp.eq.s32.totalorder %s36, 1
      %p158 = por %p156, %p157
      %p160 = scmp.ne.s32.totalorder %s145, %s159
      %p161 = scmp.eq.s32.totalorder %s36, 0
      %p162 = por %p160, %p161
      %s164 = sadd.s32 %s163, 1
      %p167 = scmp.eq.s32.totalorder %s30, 1
      %p168 = scmp.ne.s32.totalorder %s163, %s165
      %p169 = scmp.eq.s32.totalorder %s30, 0
      %p170 = por %p168, %p169
      %p171 = scmp.ne.s32.totalorder %s163, %s165
      %p172 = scmp.eq.s32.totalorder %s35, 1
      %p173 = por %p171, %p172
      %p174 = scmp.ne.s32.totalorder %s165, %s166
      %p175 = scmp.eq.s32.totalorder %s35, 0
      %p176 = por %p174, %p175
      %p177 = scmp.ne.s32.totalorder %s165, %s166
      %p178 = scmp.eq.s32.totalorder %s36, 1
      %p179 = por %p177, %p178
      %p181 = scmp.ne.s32.totalorder %s166, %s180
      %p182 = scmp.eq.s32.totalorder %s36, 0
      %p183 = por %p181, %p182
      %s185 = sadd.s32 %s184, 1
      %p188 = scmp.eq.s32.totalorder %s30, 1
      %p189 = scmp.ne.s32.totalorder %s184, %s186
      %p190 = scmp.eq.s32.totalorder %s30, 0
      %p191 = por %p189, %p190
      %p192 = scmp.ne.s32.totalorder %s184, %s186
      %p193 = scmp.eq.s32.totalorder %s35, 1
      %p194 = por %p192, %p193
      %p195 = scmp.ne.s32.totalorder %s186, %s187
      %p196 = scmp.eq.s32.totalorder %s35, 0
      %p197 = por %p195, %p196
      %p198 = scmp.ne.s32.totalorder %s186, %s187
      %p199 = scmp.eq.s32.totalorder %s36, 1
      %p200 = por %p198, %p199
      %p202 = scmp.ne.s32.totalorder %s187, %s201
      %p203 = scmp.eq.s32.totalorder %s36, 0
      %p204 = por %p202, %p203
      %s206 = sadd.s32 %s205, 1
      %p209 = scmp.eq.s32.totalorder %s30, 1
      %p210 = scmp.ne.s32.totalorder %s205, %s207
      %p211 = scmp.eq.s32.totalorder %s30, 0
      %p212 = por %p210, %p211
      %p213 = scmp.ne.s32.totalorder %s205, %s207
      %p214 = scmp.eq.s32.totalorder %s35, 1
      %p215 = por %p213, %p214
      %p216 = scmp.ne.s32.totalorder %s207, %s208
      %p217 = scmp.eq.s32.totalorder %s35, 0
      %p218 = por %p216, %p217
      %p219 = scmp.ne.s32.totalorder %s207, %s208
      %p220 = scmp.eq.s32.totalorder %s36, 1
      %p221 = por %p219, %p220
      %p223 = scmp.ne.s32.totalorder %s208, %s222
      %p224 = scmp.eq.s32.totalorder %s36, 0
      %p225 = por %p223, %p224
      %s227 = sadd.s32 %s226, 1
      %p230 = scmp.eq.s32.totalorder %s30, 1
      %p231 = scmp.ne.s32.totalorder %s226, %s228
      %p232 = scmp.eq.s32.totalorder %s30, 0
      %p233 = por %p231, %p232
      %p234 = scmp.ne.s32.totalorder %s226, %s228
      %p235 = scmp.eq.s32.totalorder %s35, 1
      %p236 = por %p234, %p235
      %p237 = scmp.ne.s32.totalorder %s228, %s229
      %p238 = scmp.eq.s32.totalorder %s35, 0
      %p239 = por %p237, %p238
      %p240 = scmp.ne.s32.totalorder %s228, %s229
      %p241 = scmp.eq.s32.totalorder %s36, 1
      %p242 = por %p240, %p241
      %p244 = scmp.ne.s32.totalorder %s229, %s243
      %p245 = scmp.eq.s32.totalorder %s36, 0
      %p246 = por %p244, %p245
      %s248 = sadd.s32 %s247, 1
      %p251 = scmp.eq.s32.totalorder %s30, 1
      %p252 = scmp.ne.s32.totalorder %s247, %s249
      %p253 = scmp.eq.s32.totalorder %s30, 0
      %p254 = por %p252, %p253
      %p255 = scmp.ne.s32.totalorder %s247, %s249
      %p256 = scmp.eq.s32.totalorder %s35, 1
      %p257 = por %p255, %p256
      %p258 = scmp.ne.s32.totalorder %s249, %s250
      %p259 = scmp.eq.s32.totalorder %s35, 0
      %p260 = por %p258, %p259
      %p261 = scmp.ne.s32.totalorder %s249, %s250
      %p262 = scmp.eq.s32.totalorder %s36, 1
      %p263 = por %p261, %p262
      %p265 = scmp.ne.s32.totalorder %s250, %s264
      %p266 = scmp.eq.s32.totalorder %s36, 0
      %p267 = por %p265, %p266
      %s269 = sadd.s32 %s268, 1
      %p272 = scmp.eq.s32.totalorder %s30, 1
      %p273 = scmp.ne.s32.totalorder %s268, %s270
      %p274 = scmp.eq.s32.totalorder %s30, 0
      %p275 = por %p273, %p274
      %p276 = scmp.ne.s32.totalorder %s268, %s270
      %p277 = scmp.eq.s32.totalorder %s35, 1
      %p278 = por %p276, %p277
      %p279 = scmp.ne.s32.totalorder %s270, %s271
      %p280 = scmp.eq.s32.totalorder %s35, 0
      %p281 = por %p279, %p280
      %p282 = scmp.ne.s32.totalorder %s270, %s271
      %p283 = scmp.eq.s32.totalorder %s36, 1
      %p284 = por %p282, %p283
      %p286 = scmp.ne.s32.totalorder %s271, %s285
      %p287 = scmp.eq.s32.totalorder %s36, 0
      %p288 = por %p286, %p287
      %s290 = sadd.s32 %s289, 1
      %p293 = scmp.eq.s32.totalorder %s30, 1
      %p294 = scmp.ne.s32.totalorder %s289, %s291
      %p295 = scmp.eq.s32.totalorder %s30, 0
      %p296 = por %p294, %p295
      %p297 = scmp.ne.s32.totalorder %s289, %s291
      %p298 = scmp.eq.s32.totalorder %s35, 1
      %p299 = por %p297, %p298
      %p300 = scmp.ne.s32.totalorder %s291, %s292
      %p301 = scmp.eq.s32.totalorder %s35, 0
      %p302 = por %p300, %p301
      %p303 = scmp.ne.s32.totalorder %s291, %s292
      %p304 = scmp.eq.s32.totalorder %s36, 1
      %p305 = por %p303, %p304
      %p307 = scmp.ne.s32.totalorder %s292, %s306
      %p308 = scmp.eq.s32.totalorder %s36, 0
      %p309 = por %p307, %p308
      %s311 = sadd.s32 %s310, 1
      %p314 = scmp.eq.s32.totalorder %s30, 1
      %p315 = scmp.ne.s32.totalorder %s310, %s312
      %p316 = scmp.eq.s32.totalorder %s30, 0
      %p317 = por %p315, %p316
      %p318 = scmp.ne.s32.totalorder %s310, %s312
      %p319 = scmp.eq.s32.totalorder %s35, 1
      %p320 = por %p318, %p319
      %p321 = scmp.ne.s32.totalorder %s312, %s313
      %p322 = scmp.eq.s32.totalorder %s35, 0
      %p323 = por %p321, %p322
      %p324 = scmp.ne.s32.totalorder %s312, %s313
      %p325 = scmp.eq.s32.totalorder %s36, 1
      %p326 = por %p324, %p325
      %p328 = scmp.ne.s32.totalorder %s313, %s327
      %p329 = scmp.eq.s32.totalorder %s36, 0
      %p330 = por %p328, %p329
      %s332 = sadd.s32 %s331, 1
      %p335 = scmp.eq.s32.totalorder %s30, 1
      %p336 = scmp.ne.s32.totalorder %s331, %s333
      %p337 = scmp.eq.s32.totalorder %s30, 0
      %p338 = por %p336, %p337
      %p339 = scmp.ne.s32.totalorder %s331, %s333
      %p340 = scmp.eq.s32.totalorder %s35, 1
      %p341 = por %p339, %p340
      %p342 = scmp.ne.s32.totalorder %s333, %s334
      %p343 = scmp.eq.s32.totalorder %s35, 0
      %p344 = por %p342, %p343
      %p345 = scmp.ne.s32.totalorder %s333, %s334
      %p346 = scmp.eq.s32.totalorder %s36, 1
      %p347 = por %p345, %p346
      %p349 = scmp.ne.s32.totalorder %s334, %s348
      %p350 = scmp.eq.s32.totalorder %s36, 0
      %p351 = por %p349, %p350
      %s353 = sadd.s32 %s352, 1
      %p356 = scmp.eq.s32.totalorder %s30, 1
      %p357 = scmp.ne.s32.totalorder %s352, %s354
      %p358 = scmp.eq.s32.totalorder %s30, 0
      %p359 = por %p357, %p358
      %p360 = scmp.ne.s32.totalorder %s352, %s354
      %p361 = scmp.eq.s32.totalorder %s35, 1
      %p362 = por %p360, %p361
      %p363 = scmp.ne.s32.totalorder %s354, %s355
      %p364 = scmp.eq.s32.totalorder %s35, 0
      %p365 = por %p363, %p364
      %p366 = scmp.ne.s32.totalorder %s354, %s355
      %p367 = scmp.eq.s32.totalorder %s36, 1
      %p368 = por %p366, %p367
      %p370 = scmp.ne.s32.totalorder %s355, %s369
      %p371 = scmp.eq.s32.totalorder %s36, 0
      %p372 = por %p370, %p371
      %s374 = sadd.s32 %s373, 1
      %p377 = scmp.eq.s32.totalorder %s30, 1
      %p378 = scmp.ne.s32.totalorder %s373, %s375
      %p379 = scmp.eq.s32.totalorder %s30, 0
      %p380 = por %p378, %p379
      %p381 = scmp.ne.s32.totalorder %s373, %s375
      %p382 = scmp.eq.s32.totalorder %s35, 1
      %p383 = por %p381, %p382
      %p384 = scmp.ne.s32.totalorder %s375, %s376
      %p385 = scmp.eq.s32.totalorder %s35, 0
      %p386 = por %p384, %p385
      %p387 = scmp.ne.s32.totalorder %s375, %s376
      %p388 = scmp.eq.s32.totalorder %s36, 1
      %p389 = por %p387, %p388
      %p391 = scmp.ne.s32.totalorder %s376, %s390
      %p392 = scmp.eq.s32.totalorder %s36, 0
      %p393 = por %p391, %p392
      %s395 = sadd.s32 %s394, 1
      %p398 = scmp.eq.s32.totalorder %s30, 1
      %p399 = scmp.ne.s32.totalorder %s394, %s396
      %p400 = scmp.eq.s32.totalorder %s30, 0
      %p401 = por %p399, %p400
      %p402 = scmp.ne.s32.totalorder %s394, %s396
      %p403 = scmp.eq.s32.totalorder %s35, 1
      %p404 = por %p402, %p403
      %p405 = scmp.ne.s32.totalorder %s396, %s397
      %p406 = scmp.eq.s32.totalorder %s35, 0
      %p407 = por %p405, %p406
      %p408 = scmp.ne.s32.totalorder %s396, %s397
      %p409 = scmp.eq.s32.totalorder %s36, 1
      %p410 = por %p408, %p409
      %p412 = scmp.ne.s32.totalorder %s397, %s411
      %p413 = scmp.eq.s32.totalorder %s36, 0
      %p414 = por %p412, %p413
      %s416 = sadd.s32 %s415, 1
      %p419 = scmp.eq.s32.totalorder %s30, 1
      %p420 = scmp.ne.s32.totalorder %s415, %s417
      %p421 = scmp.eq.s32.totalorder %s30, 0
      %p422 = por %p420, %p421
      %p423 = scmp.ne.s32.totalorder %s415, %s417
      %p424 = scmp.eq.s32.totalorder %s35, 1
      %p425 = por %p423, %p424
      %p426 = scmp.ne.s32.totalorder %s417, %s418
      %p427 = scmp.eq.s32.totalorder %s35, 0
      %p428 = por %p426, %p427
      %p429 = scmp.ne.s32.totalorder %s417, %s418
      %p430 = scmp.eq.s32.totalorder %s36, 1
      %p431 = por %p429, %p430
      %p433 = scmp.ne.s32.totalorder %s418, %s432
      %p434 = scmp.eq.s32.totalorder %s36, 0
      %p435 = por %p433, %p434
      %s437 = sadd.s32 %s436, 1
      %p440 = scmp.eq.s32.totalorder %s30, 1
      %p441 = scmp.ne.s32.totalorder %s436, %s438
      %p442 = scmp.eq.s32.totalorder %s30, 0
      %p443 = por %p441, %p442
      %p444 = scmp.ne.s32.totalorder %s436, %s438
      %p445 = scmp.eq.s32.totalorder %s35, 1
      %p446 = por %p444, %p445
      %p447 = scmp.ne.s32.totalorder %s438, %s439
      %p448 = scmp.eq.s32.totalorder %s35, 0
      %p449 = por %p447, %p448
      %p450 = scmp.ne.s32.totalorder %s438, %s439
      %p451 = scmp.eq.s32.totalorder %s36, 1
      %p452 = por %p450, %p451
      %p454 = scmp.ne.s32.totalorder %s439, %s453
      %p455 = scmp.eq.s32.totalorder %s36, 0
      %p456 = por %p454, %p455
      %s458 = sadd.s32 %s457, 1
      %p461 = scmp.eq.s32.totalorder %s30, 1
      %p462 = scmp.ne.s32.totalorder %s457, %s459
      %p463 = scmp.eq.s32.totalorder %s30, 0
      %p464 = por %p462, %p463
      %p465 = scmp.ne.s32.totalorder %s457, %s459
      %p466 = scmp.eq.s32.totalorder %s35, 1
      %p467 = por %p465, %p466
      %p468 = scmp.ne.s32.totalorder %s459, %s460
      %p469 = scmp.eq.s32.totalorder %s35, 0
      %p470 = por %p468, %p469
      %p471 = scmp.ne.s32.totalorder %s459, %s460
      %p472 = scmp.eq.s32.totalorder %s36, 1
      %p473 = por %p471, %p472
      %p475 = scmp.ne.s32.totalorder %s460, %s474
      %p476 = scmp.eq.s32.totalorder %s36, 0
      %p477 = por %p475, %p476
      %s479 = sadd.s32 %s478, 1
      %p482 = scmp.eq.s32.totalorder %s30, 1
      %p483 = scmp.ne.s32.totalorder %s478, %s480
      %p484 = scmp.eq.s32.totalorder %s30, 0
      %p485 = por %p483, %p484
      %p486 = scmp.ne.s32.totalorder %s478, %s480
      %p487 = scmp.eq.s32.totalorder %s35, 1
      %p488 = por %p486, %p487
      %p489 = scmp.ne.s32.totalorder %s480, %s481
      %p490 = scmp.eq.s32.totalorder %s35, 0
      %p491 = por %p489, %p490
      %p492 = scmp.ne.s32.totalorder %s480, %s481
      %p493 = scmp.eq.s32.totalorder %s36, 1
      %p494 = por %p492, %p493
      %p496 = scmp.ne.s32.totalorder %s481, %s495
      %p497 = scmp.eq.s32.totalorder %s36, 0
      %p498 = por %p496, %p497
      %s499 = ssub.s32 %s30, %s37
      %p500 = scmp.eq.s32.totalorder %s499, 0
      %s502 = sadd.s32 %s501, 1
      %s503 = scalar_select %p500, %s501, %s502
      %p506 = pneg %p500
      %p507 = scmp.eq.s32.totalorder %s30, 1
      %p508 = por %p506, %p507
      %p509 = scmp.ne.s32.totalorder %s501, %s504
      %p510 = scmp.eq.s32.totalorder %s30, 0
      %p511 = por %p509, %p510
      %p512 = scmp.ne.s32.totalorder %s501, %s504
      %p513 = scmp.eq.s32.totalorder %s35, 1
      %p514 = por %p512, %p513
      %p515 = scmp.ne.s32.totalorder %s504, %s505
      %p516 = scmp.eq.s32.totalorder %s35, 0
      %p517 = por %p515, %p516
      %p518 = scmp.ne.s32.totalorder %s504, %s505
      %p519 = scmp.eq.s32.totalorder %s36, 1
      %p520 = por %p518, %p519
      %p522 = scmp.ne.s32.totalorder %s505, %s521
      %p523 = scmp.eq.s32.totalorder %s36, 0
      %p524 = por %p522, %p523
      %p525 = scmp.le.s32.totalorder 1, %s30
      %p526 = scmp.lt.s32.totalorder %s30, 3
      %p527 = pnand %p525, %p526
      %p528 = pneg %p527
      // Predicated region
      $region9: #{tpu_custom_call.1} parent=5 // pred_check
        _
      $region10: #{tpu_custom_call.1} parent=5 // pred_check_branch
        %530 = sbr.rel (%p527) target = $region12
      $region11: #{tpu_custom_call.1} parent=5 // pred_region
        %s531 = ssub.s32 %s30, 1
        // Predicated region
        $region13: #{tpu_custom_call.1} parent=11 // pred_check
          %p532 = pneg %p155
        $region14: #{tpu_custom_call.1} parent=11 // pred_check_branch
          %534 = sbr.rel (%p532) target = $region16
        $region15: #{tpu_custom_call.1} parent=11 // pred_region
          _
        $region16: #{tpu_custom_call.1} parent=11 // pred_fallthru
          _
        // Predicated region
        $region17: #{tpu_custom_call.1} parent=11 // pred_check
          %p535 = pneg %p176
        $region18: #{tpu_custom_call.1} parent=11 // pred_check_branch
          %537 = sbr.rel (%p535) target = $region20
        $region19: #{tpu_custom_call.1} parent=11 // pred_region
          _
        $region20: #{tpu_custom_call.1} parent=11 // pred_fallthru
          _
        // Predicated region
        $region21: #{tpu_custom_call.1} parent=11 // pred_check
          %p538 = pneg %p197
        $region22: #{tpu_custom_call.1} parent=11 // pred_check_branch
          %540 = sbr.rel (%p538) target = $region24
        $region23: #{tpu_custom_call.1} parent=11 // pred_region
          _
        $region24: #{tpu_custom_call.1} parent=11 // pred_fallthru
          _
        // Predicated region
        $region25: #{tpu_custom_call.1} parent=11 // pred_check
          %p541 = pneg %p218
        $region26: #{tpu_custom_call.1} parent=11 // pred_check_branch
          %543 = sbr.rel (%p541) target = $region28
        $region27: #{tpu_custom_call.1} parent=11 // pred_region
          _
        $region28: #{tpu_custom_call.1} parent=11 // pred_fallthru
          _
        // Predicated region
        $region29: #{tpu_custom_call.1} parent=11 // pred_check
          %p544 = pneg %p239
        $region30: #{tpu_custom_call.1} parent=11 // pred_check_branch
          %546 = sbr.rel (%p544) target = $region32
        $region31: #{tpu_custom_call.1} parent=11 // pred_region
          _
        $region32: #{tpu_custom_call.1} parent=11 // pred_fallthru
          _
        // Predicated region
        $region33: #{tpu_custom_call.1} parent=11 // pred_check
          %p547 = pneg %p260
        $region34: #{tpu_custom_call.1} parent=11 // pred_check_branch
          %549 = sbr.rel (%p547) target = $region36
        $region35: #{tpu_custom_call.1} parent=11 // pred_region
          _
        $region36: #{tpu_custom_call.1} parent=11 // pred_fallthru
          _
        // Predicated region
        $region37: #{tpu_custom_call.1} parent=11 // pred_check
          %p550 = pneg %p281
        $region38: #{tpu_custom_call.1} parent=11 // pred_check_branch
          %552 = sbr.rel (%p550) target = $region40
        $region39: #{tpu_custom_call.1} parent=11 // pred_region
          _
        $region40: #{tpu_custom_call.1} parent=11 // pred_fallthru
          _
        // Predicated region
        $region41: #{tpu_custom_call.1} parent=11 // pred_check
          %p553 = pneg %p302
        $region42: #{tpu_custom_call.1} parent=11 // pred_check_branch
          %555 = sbr.rel (%p553) target = $region44
        $region43: #{tpu_custom_call.1} parent=11 // pred_region
          _
        $region44: #{tpu_custom_call.1} parent=11 // pred_fallthru
          _
        // Predicated region
        $region45: #{tpu_custom_call.1} parent=11 // pred_check
          %p556 = pneg %p323
        $region46: #{tpu_custom_call.1} parent=11 // pred_check_branch
          %558 = sbr.rel (%p556) target = $region48
        $region47: #{tpu_custom_call.1} parent=11 // pred_region
          _
        $region48: #{tpu_custom_call.1} parent=11 // pred_fallthru
          _
        // Predicated region
        $region49: #{tpu_custom_call.1} parent=11 // pred_check
          %p559 = pneg %p344
        $region50: #{tpu_custom_call.1} parent=11 // pred_check_branch
          %561 = sbr.rel (%p559) target = $region52
        $region51: #{tpu_custom_call.1} parent=11 // pred_region
          _
        $region52: #{tpu_custom_call.1} parent=11 // pred_fallthru
          _
        // Predicated region
        $region53: #{tpu_custom_call.1} parent=11 // pred_check
          %p562 = pneg %p365
        $region54: #{tpu_custom_call.1} parent=11 // pred_check_branch
          %564 = sbr.rel (%p562) target = $region56
        $region55: #{tpu_custom_call.1} parent=11 // pred_region
          _
        $region56: #{tpu_custom_call.1} parent=11 // pred_fallthru
          _
        // Predicated region
        $region57: #{tpu_custom_call.1} parent=11 // pred_check
          %p565 = pneg %p386
        $region58: #{tpu_custom_call.1} parent=11 // pred_check_branch
          %567 = sbr.rel (%p565) target = $region60
        $region59: #{tpu_custom_call.1} parent=11 // pred_region
          _
        $region60: #{tpu_custom_call.1} parent=11 // pred_fallthru
          _
        // Predicated region
        $region61: #{tpu_custom_call.1} parent=11 // pred_check
          %p568 = pneg %p407
        $region62: #{tpu_custom_call.1} parent=11 // pred_check_branch
          %570 = sbr.rel (%p568) target = $region64
        $region63: #{tpu_custom_call.1} parent=11 // pred_region
          _
        $region64: #{tpu_custom_call.1} parent=11 // pred_fallthru
          _
        // Predicated region
        $region65: #{tpu_custom_call.1} parent=11 // pred_check
          %p571 = pneg %p428
        $region66: #{tpu_custom_call.1} parent=11 // pred_check_branch
          %573 = sbr.rel (%p571) target = $region68
        $region67: #{tpu_custom_call.1} parent=11 // pred_region
          _
        $region68: #{tpu_custom_call.1} parent=11 // pred_fallthru
          _
        // Predicated region
        $region69: #{tpu_custom_call.1} parent=11 // pred_check
          %p574 = pneg %p449
        $region70: #{tpu_custom_call.1} parent=11 // pred_check_branch
          %576 = sbr.rel (%p574) target = $region72
        $region71: #{tpu_custom_call.1} parent=11 // pred_region
          _
        $region72: #{tpu_custom_call.1} parent=11 // pred_fallthru
          _
        // Predicated region
        $region73: #{tpu_custom_call.1} parent=11 // pred_check
          %p577 = pneg %p470
        $region74: #{tpu_custom_call.1} parent=11 // pred_check_branch
          %579 = sbr.rel (%p577) target = $region76
        $region75: #{tpu_custom_call.1} parent=11 // pred_region
          _
        $region76: #{tpu_custom_call.1} parent=11 // pred_fallthru
          _
        // Predicated region
        $region77: #{tpu_custom_call.1} parent=11 // pred_check
          %p580 = pneg %p491
        $region78: #{tpu_custom_call.1} parent=11 // pred_check_branch
          %582 = sbr.rel (%p580) target = $region80
        $region79: #{tpu_custom_call.1} parent=11 // pred_region
          _
        $region80: #{tpu_custom_call.1} parent=11 // pred_fallthru
          _
      $region12: #{tpu_custom_call.1} parent=5 // pred_fallthru
        _
      %p583 = scmp.lt.s32.totalorder %s30, 2
      // Predicated region
      $region81: #{tpu_custom_call.1} parent=5 // pred_check
        %p584 = pneg %p583
      $region82: #{tpu_custom_call.1} parent=5 // pred_check_branch
        %586 = sbr.rel (%p584) target = $region84
      $region83: #{tpu_custom_call.1} parent=5 // pred_region
        // Predicated region
        $region85: #{tpu_custom_call.1} parent=83 // pred_check
          %p587 = pneg %p50
        $region86: #{tpu_custom_call.1} parent=83 // pred_check_branch
          %589 = sbr.rel (%p587) target = $region88
        $region87: #{tpu_custom_call.1} parent=83 // pred_region
          %p590 = scmp.lt.s32.totalorder %s30, 1
          %s591 = scalar_select %p590, %s30, 1
          %s592 = smul.addr %s591, 4
          %s593 = scalar_lea.vmem %s0, %s592
        $region88: #{tpu_custom_call.1} parent=83 // pred_fallthru
          _
        // Predicated region
        $region89: #{tpu_custom_call.1} parent=83 // pred_check
          %p594 = pneg %p76
        $region90: #{tpu_custom_call.1} parent=83 // pred_check_branch
          %596 = sbr.rel (%p594) target = $region92
        $region91: #{tpu_custom_call.1} parent=83 // pred_region
          %p597 = scmp.lt.s32.totalorder %s30, 1
          %s598 = scalar_select %p597, %s30, 1
          %s599 = smul.addr %s598, 4
          %s600 = scalar_lea.vmem %s1, %s599
        $region92: #{tpu_custom_call.1} parent=83 // pred_fallthru
          _
        // Predicated region
        $region93: #{tpu_custom_call.1} parent=83 // pred_check
          %p601 = pneg %p102
        $region94: #{tpu_custom_call.1} parent=83 // pred_check_branch
          %603 = sbr.rel (%p601) target = $region96
        $region95: #{tpu_custom_call.1} parent=83 // pred_region
          %p604 = scmp.lt.s32.totalorder %s30, 1
          %s605 = scalar_select %p604, %s30, 1
          %s606 = smul.addr %s605, 4
          %s607 = scalar_lea.vmem %s2, %s606
        $region96: #{tpu_custom_call.1} parent=83 // pred_fallthru
          _
        // Predicated region
        $region97: #{tpu_custom_call.1} parent=83 // pred_check
          %p608 = pneg %p128
        $region98: #{tpu_custom_call.1} parent=83 // pred_check_branch
          %610 = sbr.rel (%p608) target = $region100
        $region99: #{tpu_custom_call.1} parent=83 // pred_region
          %s611 = sand.u32 %s118, 1
          %s612 = sand.u32 %s118, 1
          %s613 = smul.addr %s612, 16
          %s614 = scalar_lea.vmem [#allocation2], %s613
          %s615 = smul.addr %s30, 8
          %s616 = scalar_lea.vmem %s3, %s615
          // Predicated region
          $region101: #{tpu_custom_call.1} parent=99 // pred_check
            _
          $region102: #{tpu_custom_call.1} parent=99 // pred_check_branch
            %618 = sbr.rel (0) target = $region104
          $region103: #{tpu_custom_call.1} parent=99 // pred_region
            // Predicated region
            $region105: #{tpu_custom_call.1} parent=103 // pred_check
              _
            $region106: #{tpu_custom_call.1} parent=103 // pred_check_branch
              %620 = sbr.rel (0) target = $region108
            $region107: #{tpu_custom_call.1} parent=103 // pred_region
              // Predicated region
              $region120: #{tpu_custom_call.1} parent=107 // pred_check
                _
              $region121: #{tpu_custom_call.1} parent=107 // pred_check_branch
                %638 = sbr.rel (0) target = $region123
              $region122: #{tpu_custom_call.1} parent=107 // pred_region
                loop: start=0, step=1, limit=1
                $region124: #{tpu_custom_call.1} parent=122 // loop_pre_header
                  _
                $region125: #{tpu_custom_call.1} parent=122 // loop_header
                  %s640 = sphi 0, %s644
                  %p641 = scmp.ge.s32.totalorder %s640, 1
                  %s645 = sphi %s616, %s616
                  %s646 = sphi %s614, %s614
                $region126: #{tpu_custom_call.1} parent=122 // loop_header_branch
                  %643 = sbr.rel (%p641) target = $region130
                $region127: #{tpu_custom_call.1} parent=122 // loop_body
                  %v647 = vld [vmem:[%s645] sm:$0xff]
                  %648 = vst [vmem:[%s646] sm:$0xff] %v647
                  %v649 = vld [vmem:[%s645 + $0x10] sm:$0xff]
                  %650 = vst [vmem:[%s646 + $0x8] sm:$0xff] %v649
                $region128: #{tpu_custom_call.1} parent=122 // loop_footer
                  %s644 = sadd.s32 1, %s640
                $region129: #{tpu_custom_call.1} parent=122 // loop_footer_branch
                  %639 = sbr.rel target = $region125
                $region130: #{tpu_custom_call.1} parent=122 // loop_exit
                  _
              $region123: #{tpu_custom_call.1} parent=107 // pred_fallthru
                _
              // Predicated region
              $region131: #{tpu_custom_call.1} parent=107 // pred_check
                _
              $region132: #{tpu_custom_call.1} parent=107 // pred_check_branch
                %652 = sbr.rel target = $region134
              $region133: #{tpu_custom_call.1} parent=107 // pred_region
                _
              $region134: #{tpu_custom_call.1} parent=107 // pred_fallthru
                _
            $region108: #{tpu_custom_call.1} parent=103 // pred_fallthru
              _
            // Predicated region
            $region109: #{tpu_custom_call.1} parent=103 // pred_check
              _
            $region110: #{tpu_custom_call.1} parent=103 // pred_check_branch
              %622 = sbr.rel target = $region112
            $region111: #{tpu_custom_call.1} parent=103 // pred_region
              %s624 = ssub.s32 256, 1
              loop: start=0, step=1, limit=1
              $region113: #{tpu_custom_call.1} parent=111 // loop_pre_header
                _
              $region114: #{tpu_custom_call.1} parent=111 // loop_header
                %s626 = sphi 0, %s630
                %p627 = scmp.ge.s32.totalorder %s626, 1
                %s631 = sphi %s616, %s616
                %s632 = sphi %s614, %s614
              $region115: #{tpu_custom_call.1} parent=111 // loop_header_branch
                %629 = sbr.rel (%p627) target = $region119
              $region116: #{tpu_custom_call.1} parent=111 // loop_body
                %v633 = vld [vmem:[%s631] sm:%s624]
                %634 = vst [vmem:[%s632] sm:%s624] %v633
                %v635 = vld [vmem:[%s631 + $0x10] sm:%s624]
                %636 = vst [vmem:[%s632 + $0x8] sm:%s624] %v635
              $region117: #{tpu_custom_call.1} parent=111 // loop_footer
                %s630 = sadd.s32 1, %s626
              $region118: #{tpu_custom_call.1} parent=111 // loop_footer_branch
                %625 = sbr.rel target = $region114
              $region119: #{tpu_custom_call.1} parent=111 // loop_exit
                _
            $region112: #{tpu_custom_call.1} parent=103 // pred_fallthru
              _
          $region104: #{tpu_custom_call.1} parent=99 // pred_fallthru
            _
          %653 = vnop
        $region100: #{tpu_custom_call.1} parent=83 // pred_fallthru
          _
      $region84: #{tpu_custom_call.1} parent=5 // pred_fallthru
        _
      %p654 = scmp.le.s32.totalorder 1, %s30
      %p655 = scmp.lt.s32.totalorder %s30, 3
      %p656 = pnand %p654, %p655
      %p657 = pneg %p656
      // Predicated region
      $region135: #{tpu_custom_call.1} parent=5 // pred_check
        _
      $region136: #{tpu_custom_call.1} parent=5 // pred_check_branch
        %659 = sbr.rel (%p656) target = $region138
      $region137: #{tpu_custom_call.1} parent=5 // pred_region
        %s660 = ssub.s32 %s30, 1
        %s661 = sand.u32 %s121, 1
        %s662 = sand.u32 %s121, 1
        %s663 = smul.addr %s662, 16
        %s664 = scalar_lea.vmem [#allocation2], %s663
        // Predicated region
        $region139: #{tpu_custom_call.1} parent=137 // pred_check
          %p665 = pneg %p134
        $region140: #{tpu_custom_call.1} parent=137 // pred_check_branch
          %667 = sbr.rel (%p665) target = $region142
        $region141: #{tpu_custom_call.1} parent=137 // pred_region
          _
        $region142: #{tpu_custom_call.1} parent=137 // pred_fallthru
          _
        %p668 = scmp.lt.s32.totalorder %s35, 1
        %s669 = scalar_select %p668, %s35, 1
        %s670 = smul.addr %s669, 4
        %s671 = scalar_lea.vmem %s0, %s670
        %p672 = pneg %p56
        %p673 = pneg %p53
        %p674 = scmp.lt.s32.totalorder %s35, 1
        %s675 = scalar_select %p674, %s35, 1
        %s676 = smul.addr %s675, 4
        %s677 = scalar_lea.vmem %s1, %s676
        %p678 = pneg %p82
        %p679 = pneg %p79
        %p680 = scmp.lt.s32.totalorder %s35, 1
        %s681 = scalar_select %p680, %s35, 1
        %s682 = smul.addr %s681, 4
        %s683 = scalar_lea.vmem %s2, %s682
        %p684 = pneg %p108
        %p685 = pneg %p105
        %s686 = sand.u32 %s121, 1
        %s687 = sand.u32 %s121, 1
        %s688 = smul.addr %s687, 16
        %s689 = scalar_lea.vmem [#allocation2], %s688
        %p690 = pneg %p134
        %p691 = pneg %p131
        %p692 = pneg %p155
        %p693 = pneg %p152
        %p694 = pneg %p176
        %p695 = pneg %p173
        %p696 = pneg %p197
        %p697 = pneg %p194
        %p698 = pneg %p218
        %p699 = pneg %p215
        %p700 = pneg %p239
        %p701 = pneg %p236
        %p702 = pneg %p260
        %p703 = pneg %p257
        %p704 = pneg %p281
        %p705 = pneg %p278
        %p706 = pneg %p302
        %p707 = pneg %p299
        %p708 = pneg %p323
        %p709 = pneg %p320
        %p710 = pneg %p344
        %p711 = pneg %p341
        %p712 = pneg %p365
        %p713 = pneg %p362
        %p714 = pneg %p386
        %p715 = pneg %p383
        %p716 = pneg %p407
        %p717 = pneg %p404
        %p718 = pneg %p428
        %p719 = pneg %p425
        %p720 = pneg %p449
        %p721 = pneg %p446
        %p722 = pneg %p470
        %p723 = pneg %p467
        %p724 = pneg %p491
        %p725 = pneg %p488
        %p726 = pneg %p517
        %p727 = pneg %p514
        %s728 = sand.u32 %s504, 1
        %s729 = scalar_lea.sflag [#allocation4], %s728
        %s730 = sand.u32 %s504, 1
        %s731 = smul.addr %s730, 4
        %s732 = scalar_lea.vmem [#allocation3], %s731
        %p733 = scmp.lt.s32.totalorder %s35, 1
        %s734 = scalar_select %p733, %s35, 1
        %s735 = smul.addr %s734, 4
        %s736 = scalar_lea.vmem %s0, %s735
        %p737 = scmp.lt.s32.totalorder %s35, 1
        %s738 = scalar_select %p737, %s35, 1
        %s739 = smul.addr %s738, 4
        %s740 = scalar_lea.vmem %s1, %s739
        %p741 = scmp.lt.s32.totalorder %s35, 1
        %s742 = scalar_select %p741, %s35, 1
        %s743 = smul.addr %s742, 4
        %s744 = scalar_lea.vmem %s2, %s743
        %v745 = vld [vmem:[%s736] sm:$0x7]
        %v746 = vld [vmem:[%s740] sm:$0x7]
        %v747 = vld [vmem:[%s744] sm:$0x7]
        %v748 = vld [vmem:[%s664] sm:$0xff]
        %v749 = vld [vmem:[%s664 + $0x8] sm:$0xff]
        %v750 = vld [vmem:[%s4] sm:$0xff]
        %v751 = vld [vmem:[%s4 + $0x8] sm:$0xff]
        %v752 = vld [vmem:[%s4 + $0x10] sm:$0xff]
        %v753 = vld [vmem:[%s4 + $0x18] sm:$0xff]
        %v754 = vld [vmem:[%s5] sm:$0xff]
        %v755 = vld [vmem:[%s5 + $0x8] sm:$0xff]
        %v756 = vld [vmem:[%s5 + $0x10] sm:$0xff]
        %v757 = vld [vmem:[%s5 + $0x18] sm:$0xff]
        %vm758 = vcmask 23552
        %v760 = vsel %vm758, %v754, 0
        %v763 = vsel %vm758, %v755, 0
        %v766 = vsel %vm758, %v756, 0
        %v769 = vsel %vm758, %v757, 0
        %vm771 = vcmask 1042432
        %v773 = vsel %vm771, %v746, 0
        %775 = vmatpush.msra.mxu0 0.0
        %776 = vmatpush.msra.mxu0 0.0
        %777 = vmatpush.msra.mxu0 0.0
        %778 = vmatpush.msra.mxu0 0.0
        %779 = vmatpush.msra.mxu0 0.0
        %780 = vmatpush.msra.mxu0 0.0
        %781 = vmatpush.msra.mxu0 0.0
        %782 = vmatpush.msra.mxu0 0.0
        %783 = vmatpush.msra.mxu0 0.0
        %784 = vmatpush.msra.mxu0 0.0
        %785 = vmatpush.msra.mxu0 0.0
        %786 = vmatpush.msra.mxu0 0.0
        %787 = vmatpush.msra.mxu0 0.0
        %788 = vmatpush.msra.mxu0 0.0
        %789 = vmatpush.msra.mxu0 0.0
        %790 = vmatpush.msra.mxu0 %v773
        %791 = vmatmul.f32.gmra.mxu0 %v760
        %v792 = vpop.f32.mrf.mxu0
        %v793 = vadd.f32 0.0, %v792
        %794 = vmatmul.f32.gmra.mxu0 %v763
        %v795 = vpop.f32.mrf.mxu0
        %v796 = vadd.f32 0.0, %v795
        %797 = vmatmul.f32.gmra.mxu0 %v766
        %v798 = vpop.f32.mrf.mxu0
        %v799 = vadd.f32 0.0, %v798
        %800 = vmatmul.f32.gmra.mxu0 %v769
        %v801 = vpop.f32.mrf.mxu0
        %v802 = vadd.f32 0.0, %v801
        %803 = vdwg.mxu0
        %v805 = vsel %vm758, %v750, 0
        %v808 = vsel %vm758, %v751, 0
        %v811 = vsel %vm758, %v752, 0
        %v814 = vsel %vm758, %v753, 0
        %v817 = vsel %vm771, %v745, 0
        %819 = vmatpush.msra.mxu0 0.0
        %820 = vmatpush.msra.mxu0 0.0
        %821 = vmatpush.msra.mxu0 0.0
        %822 = vmatpush.msra.mxu0 0.0
        %823 = vmatpush.msra.mxu0 0.0
        %824 = vmatpush.msra.mxu0 0.0
        %825 = vmatpush.msra.mxu0 0.0
        %826 = vmatpush.msra.mxu0 0.0
        %827 = vmatpush.msra.mxu0 0.0
        %828 = vmatpush.msra.mxu0 0.0
        %829 = vmatpush.msra.mxu0 0.0
        %830 = vmatpush.msra.mxu0 0.0
        %831 = vmatpush.msra.mxu0 0.0
        %832 = vmatpush.msra.mxu0 0.0
        %833 = vmatpush.msra.mxu0 0.0
        %834 = vmatpush.msra.mxu0 %v817
        %835 = vmatmul.f32.gmra.mxu0 %v805
        %v836 = vpop.f32.mrf.mxu0
        %v837 = vadd.f32 %v793, %v836
        %838 = vmatmul.f32.gmra.mxu0 %v808
        %v839 = vpop.f32.mrf.mxu0
        %v840 = vadd.f32 %v796, %v839
        %841 = vmatmul.f32.gmra.mxu0 %v811
        %v842 = vpop.f32.mrf.mxu0
        %v843 = vadd.f32 %v799, %v842
        %844 = vmatmul.f32.gmra.mxu0 %v814
        %v845 = vpop.f32.mrf.mxu0
        %v846 = vadd.f32 %v802, %v845
        %847 = vdwg.mxu0
        %v848 = vld [vmem:[%s6] sm:$0xff]
        %v849 = vld [vmem:[%s6 + $0x8] sm:$0xff]
        %v850 = vld [vmem:[%s6 + $0x10] sm:$0xff]
        %v851 = vld [vmem:[%s6 + $0x18] sm:$0xff]
        %v852 = vand.u32 2147483647, %v746
        %vm853 = vcmp.le.f32.partialorder %v852, 0.7853982
        %vm854 = vcmp.lt.s32.totalorder %v746, 0
        %v855 = vand.u32 %v746, 2139095040
        %v856 = vshrl.u32 %v855, 23
        %v857 = vsub.s32 %v856, 127
        %v858 = vand.u32 2147483647, %v746
        %v859 = vand.u32 %v858, 8388607
        %v860 = vor.u32 %v859, 8388608
        %v861 = vsub.s32 0, %v860
        %v862 = vadd.s32 %v857, 1
        %vm863 = vcmp.gt.s32.totalorder %v862, 0
        %v864 = vsel %vm863, %v862, 0
        %v865 = vshrl.u32 %v864, 5
        %v866 = vand.u32 %v864, 31
        %v867 = vsub.s32 32, %v866
        %v868 = vshrl.u32 683565275, %v867
        %v869 = vshll.u32 683565275, %v866
        %v870 = vshrl.u32 2475754826, %v867
        %v871 = vor.u32 %v869, %v870
        %v872 = vshll.u32 2475754826, %v866
        %v873 = vshrl.u32 2131351028, %v867
        %v874 = vor.u32 %v872, %v873
        %v875 = vshll.u32 2131351028, %v866
        %v876 = vshrl.u32 2102212464, %v867
        %v877 = vor.u32 %v875, %v876
        %v878 = vshll.u32 2102212464, %v866
        %v879 = vshrl.u32 920167782, %v867
        %v880 = vor.u32 %v878, %v879
        %v881 = vshll.u32 920167782, %v866
        %v882 = vshrl.u32 1326507024, %v867
        %v883 = vor.u32 %v881, %v882
        %vm884 = vcmp.lt.s32.totalorder %v865, 1
        %vm885 = vcmp.lt.s32.totalorder %v865, 2
        %vm886 = vcmp.lt.s32.totalorder %v865, 3
        %vm887 = vcmp.lt.s32.totalorder %v865, 4
        %v888 = vsel %vm884, %v868, %v871
        %v889 = vsel %vm887, %v877, 2102212464
        %v890 = vsel %vm886, %v874, %v889
        %v891 = vsel %vm885, %v888, %v890
        %v892 = vsel %vm884, %v871, %v874
        %v893 = vsel %vm887, %v880, 920167782
        %v894 = vsel %vm886, %v877, %v893
        %v895 = vsel %vm885, %v892, %v894
        %v896 = vsel %vm884, %v874, %v877
        %v897 = vsel %vm887, %v883, 1326507024
        %v898 = vsel %vm886, %v880, %v897
        %v899 = vsel %vm885, %v896, %v898
        %v900 = vshll.u32 %v860, 8
        %v901 = vand.u32 %v900, 65535
        %v902 = vshrl.u32 %v900, 16
        %v903 = vand.u32 %v899, 65535
        %v904 = vshrl.u32 %v899, 16
        %v905 = vmul.u32 %v901, %v903
        %v906 = vmul.u32 %v901, %v904
        %v907 = vmul.u32 %v902, %v903
        %v908 = vmul.u32 %v902, %v904
        %v909 = vshll.u32 %v906, 16
        %v910 = vshrl.u32 %v906, 16
        %v911 = vshll.u32 %v907, 16
        %v912 = vshrl.u32 %v907, 16
        %vm913 = vc.u32 %v905, %v909
        %v914 = vsel %vm913, 1, 0
        %v915 = vadd.s32 %v905, %v909
        %v916 = vadd.s32 %v908, %v914
        %vm917 = vc.u32 %v915, %v911
        %v918 = vsel %vm917, 1, 0
        %v919 = vadd.s32 %v915, %v911
        %v920 = vadd.s32 %v916, %v918
        %v921 = vadd.s32 %v920, %v910
        %v922 = vadd.s32 %v921, %v912
        %v923 = vand.u32 %v900, 65535
        %v924 = vshrl.u32 %v900, 16
        %v925 = vand.u32 %v895, 65535
        %v926 = vshrl.u32 %v895, 16
        %v927 = vmul.u32 %v923, %v925
        %v928 = vmul.u32 %v923, %v926
        %v929 = vmul.u32 %v924, %v925
        %v930 = vmul.u32 %v924, %v926
        %v931 = vshll.u32 %v928, 16
        %v932 = vshrl.u32 %v928, 16
        %v933 = vshll.u32 %v929, 16
        %v934 = vshrl.u32 %v929, 16
        %vm935 = vc.u32 %v927, %v931
        %v936 = vsel %vm935, 1, 0
        %v937 = vadd.s32 %v927, %v931
        %v938 = vadd.s32 %v930, %v936
        %vm939 = vc.u32 %v937, %v933
        %v940 = vsel %vm939, 1, 0
        %v941 = vadd.s32 %v937, %v933
        %v942 = vadd.s32 %v938, %v940
        %v943 = vadd.s32 %v942, %v932
        %v944 = vadd.s32 %v943, %v934
        %v945 = vmul.u32 %v900, %v891
        %v946 = vadd.s32 %v922, %v941
        %vm947 = vc.u32 %v922, %v941
        %v948 = vadd.s32 %v944, 1
        %v949 = vsel %vm947, %v948, %v944
        %v950 = vadd.s32 %v945, %v949
        %v951 = vadd.s32 %v950, 536870912
        %v952 = vshrl.u32 %v951, 30
        %v953 = vshll.u32 %v952, 30
        %v954 = vsub.s32 %v950, %v953
        %vm955 = vcmp.lt.s32.totalorder %v954, 0
        %v956 = vsub.s32 0, %v954
        %v957 = vsel %vm955, %v956, %v954
        %v958 = vclz %v957
        %v959 = vsub.s32 %v958, 2
        %vm960 = vcmp.gt.s32.totalorder 0, %v959
        %v961 = vsel %vm960, 0, %v959
        %v962 = vsub.s32 32, %v961
        %v963 = vshll.u32 %v954, %v961
        %v964 = vshrl.u32 %v946, %v962
        %v965 = vor.u32 %v963, %v964
        %v966 = vsub.s32 4294967266, %v961
        %v967 = vadd.s32 %v966, 127
        %v968 = vshll.u32 %v967, 23
        %v969 = vor.u32 4788187, %v968
        %v970 = vand.u32 2147483647, %v969
        %v972 = vcvt.s32.f32 %v965
        %v973 = vmul.f32 %v972, %v970
        %v974 = vxor.u32 %v973, 2147483648
        %v975 = vsel %vm854, %v974, %v973
        %v976 = vsub.s32 4, %v952
        %v977 = vsel %vm854, %v976, %v952
        %v978 = vsel %vm853, %v746, %v975
        %v979 = vsel %vm853, 0, %v977
        %v980 = vmul.f32 %v978, %v978
        %v981 = vmul.f32 %v980, -0.001358992
        %v982 = vadd.f32 %v981, 0.041655596
        %v983 = vmul.f32 %v980, %v982
        %v984 = vadd.f32 %v983, -0.4999988
        %v985 = vmul.f32 %v980, %v984
        %v986 = vadd.f32 1.0, %v985
        %v987 = vmul.f32 %v978, %v978
        %v988 = vmul.f32 %v987, -0.00019511016
        %v989 = vadd.f32 %v988, 0.008332121
        %v990 = vmul.f32 %v987, %v989
        %v991 = vadd.f32 %v990, -0.16666654
        %v992 = vmul.f32 %v987, %v991
        %v993 = vadd.f32 %v992, 1.0
        %v994 = vmul.f32 %v993, %v978
        %vm995 = vweird.f32 %v746
        %v996 = vadd.s32 %v979, 3
        %v997 = vand.u32 %v996, 3
        %vm998 = vcmp.lt.s32.totalorder %v997, 2
        %vm999 = vcmp.eq.s32.totalorder %v997, 0
        %v1000 = vxor.u32 %v994, 2147483648
        %v1001 = vsel %vm999, %v986, %v1000
        %vm1002 = vcmp.eq.s32.totalorder %v997, 2
        %v1003 = vxor.u32 %v986, 2147483648
        %v1004 = vsel %vm1002, %v1003, %v994
        %v1005 = vsel %vm998, %v1001, %v1004
        %v1006 = vsel %vm995, nan, %v1005
        %v1008 = vsel %vm758, %v848, 0
        %v1011 = vsel %vm758, %v849, 0
        %v1014 = vsel %vm758, %v850, 0
        %v1017 = vsel %vm758, %v851, 0
        %v1020 = vsel %vm771, %v1006, 0
        %1022 = vmatpush.msra.mxu0 0.0
        %1023 = vmatpush.msra.mxu0 0.0
        %1024 = vmatpush.msra.mxu0 0.0
        %1025 = vmatpush.msra.mxu0 0.0
        %1026 = vmatpush.msra.mxu0 0.0
        %1027 = vmatpush.msra.mxu0 0.0
        %1028 = vmatpush.msra.mxu0 0.0
        %1029 = vmatpush.msra.mxu0 0.0
        %1030 = vmatpush.msra.mxu0 0.0
        %1031 = vmatpush.msra.mxu0 0.0
        %1032 = vmatpush.msra.mxu0 0.0
        %1033 = vmatpush.msra.mxu0 0.0
        %1034 = vmatpush.msra.mxu0 0.0
        %1035 = vmatpush.msra.mxu0 0.0
        %1036 = vmatpush.msra.mxu0 0.0
        %1037 = vmatpush.msra.mxu0 %v1020
        %1038 = vmatmul.f32.gmra.mxu0 %v1008
        %v1039 = vpop.f32.mrf.mxu0
        %v1040 = vadd.f32 0.0, %v1039
        %1041 = vmatmul.f32.gmra.mxu0 %v1011
        %v1042 = vpop.f32.mrf.mxu0
        %v1043 = vadd.f32 0.0, %v1042
        %1044 = vmatmul.f32.gmra.mxu0 %v1014
        %v1045 = vpop.f32.mrf.mxu0
        %v1046 = vadd.f32 0.0, %v1045
        %1047 = vmatmul.f32.gmra.mxu0 %v1017
        %v1048 = vpop.f32.mrf.mxu0
        %v1049 = vadd.f32 0.0, %v1048
        %1050 = vdwg.mxu0
        %v1051 = vadd.f32 %v837, %v1040
        %v1052 = vadd.f32 %v840, %v1043
        %v1053 = vadd.f32 %v843, %v1046
        %v1054 = vadd.f32 %v846, %v1049
        %v1055 = vld [vmem:[%s7] sm:$0xff]
        %v1056 = vld [vmem:[%s7 + $0x8] sm:$0xff]
        %v1057 = vld [vmem:[%s7 + $0x10] sm:$0xff]
        %v1058 = vld [vmem:[%s7 + $0x18] sm:$0xff]
        %v1059 = vand.u32 2147483647, %v746
        %vm1060 = vcmp.le.f32.partialorder %v1059, 0.7853982
        %vm1061 = vcmp.lt.s32.totalorder %v746, 0
        %v1062 = vand.u32 %v746, 2139095040
        %v1063 = vshrl.u32 %v1062, 23
        %v1064 = vsub.s32 %v1063, 127
        %v1065 = vand.u32 2147483647, %v746
        %v1066 = vand.u32 %v1065, 8388607
        %v1067 = vor.u32 %v1066, 8388608
        %v1068 = vsub.s32 0, %v1067
        %v1069 = vadd.s32 %v1064, 1
        %vm1070 = vcmp.gt.s32.totalorder %v1069, 0
        %v1071 = vsel %vm1070, %v1069, 0
        %v1072 = vshrl.u32 %v1071, 5
        %v1073 = vand.u32 %v1071, 31
        %v1074 = vsub.s32 32, %v1073
        %v1075 = vshrl.u32 683565275, %v1074
        %v1076 = vshll.u32 683565275, %v1073
        %v1077 = vshrl.u32 2475754826, %v1074
        %v1078 = vor.u32 %v1076, %v1077
        %v1079 = vshll.u32 2475754826, %v1073
        %v1080 = vshrl.u32 2131351028, %v1074
        %v1081 = vor.u32 %v1079, %v1080
        %v1082 = vshll.u32 2131351028, %v1073
        %v1083 = vshrl.u32 2102212464, %v1074
        %v1084 = vor.u32 %v1082, %v1083
        %v1085 = vshll.u32 2102212464, %v1073
        %v1086 = vshrl.u32 920167782, %v1074
        %v1087 = vor.u32 %v1085, %v1086
        %v1088 = vshll.u32 920167782, %v1073
        %v1089 = vshrl.u32 1326507024, %v1074
        %v1090 = vor.u32 %v1088, %v1089
        %vm1091 = vcmp.lt.s32.totalorder %v1072, 1
        %vm1092 = vcmp.lt.s32.totalorder %v1072, 2
        %vm1093 = vcmp.lt.s32.totalorder %v1072, 3
        %vm1094 = vcmp.lt.s32.totalorder %v1072, 4
        %v1095 = vsel %vm1091, %v1075, %v1078
        %v1096 = vsel %vm1094, %v1084, 2102212464
        %v1097 = vsel %vm1093, %v1081, %v1096
        %v1098 = vsel %vm1092, %v1095, %v1097
        %v1099 = vsel %vm1091, %v1078, %v1081
        %v1100 = vsel %vm1094, %v1087, 920167782
        %v1101 = vsel %vm1093, %v1084, %v1100
        %v1102 = vsel %vm1092, %v1099, %v1101
        %v1103 = vsel %vm1091, %v1081, %v1084
        %v1104 = vsel %vm1094, %v1090, 1326507024
        %v1105 = vsel %vm1093, %v1087, %v1104
        %v1106 = vsel %vm1092, %v1103, %v1105
        %v1107 = vshll.u32 %v1067, 8
        %v1108 = vand.u32 %v1107, 65535
        %v1109 = vshrl.u32 %v1107, 16
        %v1110 = vand.u32 %v1106, 65535
        %v1111 = vshrl.u32 %v1106, 16
        %v1112 = vmul.u32 %v1108, %v1110
        %v1113 = vmul.u32 %v1108, %v1111
        %v1114 = vmul.u32 %v1109, %v1110
        %v1115 = vmul.u32 %v1109, %v1111
        %v1116 = vshll.u32 %v1113, 16
        %v1117 = vshrl.u32 %v1113, 16
        %v1118 = vshll.u32 %v1114, 16
        %v1119 = vshrl.u32 %v1114, 16
        %vm1120 = vc.u32 %v1112, %v1116
        %v1121 = vsel %vm1120, 1, 0
        %v1122 = vadd.s32 %v1112, %v1116
        %v1123 = vadd.s32 %v1115, %v1121
        %vm1124 = vc.u32 %v1122, %v1118
        %v1125 = vsel %vm1124, 1, 0
        %v1126 = vadd.s32 %v1122, %v1118
        %v1127 = vadd.s32 %v1123, %v1125
        %v1128 = vadd.s32 %v1127, %v1117
        %v1129 = vadd.s32 %v1128, %v1119
        %v1130 = vand.u32 %v1107, 65535
        %v1131 = vshrl.u32 %v1107, 16
        %v1132 = vand.u32 %v1102, 65535
        %v1133 = vshrl.u32 %v1102, 16
        %v1134 = vmul.u32 %v1130, %v1132
        %v1135 = vmul.u32 %v1130, %v1133
        %v1136 = vmul.u32 %v1131, %v1132
        %v1137 = vmul.u32 %v1131, %v1133
        %v1138 = vshll.u32 %v1135, 16
        %v1139 = vshrl.u32 %v1135, 16
        %v1140 = vshll.u32 %v1136, 16
        %v1141 = vshrl.u32 %v1136, 16
        %vm1142 = vc.u32 %v1134, %v1138
        %v1143 = vsel %vm1142, 1, 0
        %v1144 = vadd.s32 %v1134, %v1138
        %v1145 = vadd.s32 %v1137, %v1143
        %vm1146 = vc.u32 %v1144, %v1140
        %v1147 = vsel %vm1146, 1, 0
        %v1148 = vadd.s32 %v1144, %v1140
        %v1149 = vadd.s32 %v1145, %v1147
        %v1150 = vadd.s32 %v1149, %v1139
        %v1151 = vadd.s32 %v1150, %v1141
        %v1152 = vmul.u32 %v1107, %v1098
        %v1153 = vadd.s32 %v1129, %v1148
        %vm1154 = vc.u32 %v1129, %v1148
        %v1155 = vadd.s32 %v1151, 1
        %v1156 = vsel %vm1154, %v1155, %v1151
        %v1157 = vadd.s32 %v1152, %v1156
        %v1158 = vadd.s32 %v1157, 536870912
        %v1159 = vshrl.u32 %v1158, 30
        %v1160 = vshll.u32 %v1159, 30
        %v1161 = vsub.s32 %v1157, %v1160
        %vm1162 = vcmp.lt.s32.totalorder %v1161, 0
        %v1163 = vsub.s32 0, %v1161
        %v1164 = vsel %vm1162, %v1163, %v1161
        %v1165 = vclz %v1164
        %v1166 = vsub.s32 %v1165, 2
        %vm1167 = vcmp.gt.s32.totalorder 0, %v1166
        %v1168 = vsel %vm1167, 0, %v1166
        %v1169 = vsub.s32 32, %v1168
        %v1170 = vshll.u32 %v1161, %v1168
        %v1171 = vshrl.u32 %v1153, %v1169
        %v1172 = vor.u32 %v1170, %v1171
        %v1173 = vsub.s32 4294967266, %v1168
        %v1174 = vadd.s32 %v1173, 127
        %v1175 = vshll.u32 %v1174, 23
        %v1176 = vor.u32 4788187, %v1175
        %v1177 = vand.u32 2147483647, %v1176
        %v1179 = vcvt.s32.f32 %v1172
        %v1180 = vmul.f32 %v1179, %v1177
        %v1181 = vxor.u32 %v1180, 2147483648
        %v1182 = vsel %vm1061, %v1181, %v1180
        %v1183 = vsub.s32 4, %v1159
        %v1184 = vsel %vm1061, %v1183, %v1159
        %v1185 = vsel %vm1060, %v746, %v1182
        %v1186 = vsel %vm1060, 0, %v1184
        %v1187 = vmul.f32 %v1185, %v1185
        %v1188 = vmul.f32 %v1187, -0.001358992
        %v1189 = vadd.f32 %v1188, 0.041655596
        %v1190 = vmul.f32 %v1187, %v1189
        %v1191 = vadd.f32 %v1190, -0.4999988
        %v1192 = vmul.f32 %v1187, %v1191
        %v1193 = vadd.f32 1.0, %v1192
        %v1194 = vmul.f32 %v1185, %v1185
        %v1195 = vmul.f32 %v1194, -0.00019511016
        %v1196 = vadd.f32 %v1195, 0.008332121
        %v1197 = vmul.f32 %v1194, %v1196
        %v1198 = vadd.f32 %v1197, -0.16666654
        %v1199 = vmul.f32 %v1194, %v1198
        %v1200 = vadd.f32 %v1199, 1.0
        %v1201 = vmul.f32 %v1200, %v1185
        %vm1202 = vweird.f32 %v746
        %v1203 = vand.u32 %v1186, 3
        %vm1204 = vcmp.lt.s32.totalorder %v1203, 2
        %vm1205 = vcmp.eq.s32.totalorder %v1203, 0
        %v1206 = vxor.u32 %v1201, 2147483648
        %v1207 = vsel %vm1205, %v1193, %v1206
        %vm1208 = vcmp.eq.s32.totalorder %v1203, 2
        %v1209 = vxor.u32 %v1193, 2147483648
        %v1210 = vsel %vm1208, %v1209, %v1201
        %v1211 = vsel %vm1204, %v1207, %v1210
        %v1212 = vsel %vm1202, nan, %v1211
        %v1214 = vsel %vm758, %v1055, 0
        %v1217 = vsel %vm758, %v1056, 0
        %v1220 = vsel %vm758, %v1057, 0
        %v1223 = vsel %vm758, %v1058, 0
        %v1226 = vsel %vm771, %v1212, 0
        %1228 = vmatpush.msra.mxu0 0.0
        %1229 = vmatpush.msra.mxu0 0.0
        %1230 = vmatpush.msra.mxu0 0.0
        %1231 = vmatpush.msra.mxu0 0.0
        %1232 = vmatpush.msra.mxu0 0.0
        %1233 = vmatpush.msra.mxu0 0.0
        %1234 = vmatpush.msra.mxu0 0.0
        %1235 = vmatpush.msra.mxu0 0.0
        %1236 = vmatpush.msra.mxu0 0.0
        %1237 = vmatpush.msra.mxu0 0.0
        %1238 = vmatpush.msra.mxu0 0.0
        %1239 = vmatpush.msra.mxu0 0.0
        %1240 = vmatpush.msra.mxu0 0.0
        %1241 = vmatpush.msra.mxu0 0.0
        %1242 = vmatpush.msra.mxu0 0.0
        %1243 = vmatpush.msra.mxu0 %v1226
        %1244 = vmatmul.f32.gmra.mxu0 %v1214
        %v1245 = vpop.f32.mrf.mxu0
        %v1246 = vadd.f32 0.0, %v1245
        %1247 = vmatmul.f32.gmra.mxu0 %v1217
        %v1248 = vpop.f32.mrf.mxu0
        %v1249 = vadd.f32 0.0, %v1248
        %1250 = vmatmul.f32.gmra.mxu0 %v1220
        %v1251 = vpop.f32.mrf.mxu0
        %v1252 = vadd.f32 0.0, %v1251
        %1253 = vmatmul.f32.gmra.mxu0 %v1223
        %v1254 = vpop.f32.mrf.mxu0
        %v1255 = vadd.f32 0.0, %v1254
        %1256 = vdwg.mxu0
        %v1257 = vadd.f32 %v1051, %v1246
        %v1258 = vadd.f32 %v1052, %v1249
        %v1259 = vadd.f32 %v1053, %v1252
        %v1260 = vadd.f32 %v1054, %v1255
        %v1261 = vld [vmem:[%s8] sm:$0xff]
        %v1262 = vld [vmem:[%s8 + $0x8] sm:$0xff]
        %v1263 = vld [vmem:[%s8 + $0x10] sm:$0xff]
        %v1264 = vld [vmem:[%s8 + $0x18] sm:$0xff]
        %v1265 = vmul.f32 %v746, 2.0
        %v1266 = vand.u32 2147483647, %v1265
        %vm1267 = vcmp.le.f32.partialorder %v1266, 0.7853982
        %vm1268 = vcmp.lt.s32.totalorder %v1265, 0
        %v1269 = vand.u32 %v1265, 2139095040
        %v1270 = vshrl.u32 %v1269, 23
        %v1271 = vsub.s32 %v1270, 127
        %v1272 = vand.u32 2147483647, %v1265
        %v1273 = vand.u32 %v1272, 8388607
        %v1274 = vor.u32 %v1273, 8388608
        %v1275 = vsub.s32 0, %v1274
        %v1276 = vadd.s32 %v1271, 1
        %vm1277 = vcmp.gt.s32.totalorder %v1276, 0
        %v1278 = vsel %vm1277, %v1276, 0
        %v1279 = vshrl.u32 %v1278, 5
        %v1280 = vand.u32 %v1278, 31
        %v1281 = vsub.s32 32, %v1280
        %v1282 = vshrl.u32 683565275, %v1281
        %v1283 = vshll.u32 683565275, %v1280
        %v1284 = vshrl.u32 2475754826, %v1281
        %v1285 = vor.u32 %v1283, %v1284
        %v1286 = vshll.u32 2475754826, %v1280
        %v1287 = vshrl.u32 2131351028, %v1281
        %v1288 = vor.u32 %v1286, %v1287
        %v1289 = vshll.u32 2131351028, %v1280
        %v1290 = vshrl.u32 2102212464, %v1281
        %v1291 = vor.u32 %v1289, %v1290
        %v1292 = vshll.u32 2102212464, %v1280
        %v1293 = vshrl.u32 920167782, %v1281
        %v1294 = vor.u32 %v1292, %v1293
        %v1295 = vshll.u32 920167782, %v1280
        %v1296 = vshrl.u32 1326507024, %v1281
        %v1297 = vor.u32 %v1295, %v1296
        %vm1298 = vcmp.lt.s32.totalorder %v1279, 1
        %vm1299 = vcmp.lt.s32.totalorder %v1279, 2
        %vm1300 = vcmp.lt.s32.totalorder %v1279, 3
        %vm1301 = vcmp.lt.s32.totalorder %v1279, 4
        %v1302 = vsel %vm1298, %v1282, %v1285
        %v1303 = vsel %vm1301, %v1291, 2102212464
        %v1304 = vsel %vm1300, %v1288, %v1303
        %v1305 = vsel %vm1299, %v1302, %v1304
        %v1306 = vsel %vm1298, %v1285, %v1288
        %v1307 = vsel %vm1301, %v1294, 920167782
        %v1308 = vsel %vm1300, %v1291, %v1307
        %v1309 = vsel %vm1299, %v1306, %v1308
        %v1310 = vsel %vm1298, %v1288, %v1291
        %v1311 = vsel %vm1301, %v1297, 1326507024
        %v1312 = vsel %vm1300, %v1294, %v1311
        %v1313 = vsel %vm1299, %v1310, %v1312
        %v1314 = vshll.u32 %v1274, 8
        %v1315 = vand.u32 %v1314, 65535
        %v1316 = vshrl.u32 %v1314, 16
        %v1317 = vand.u32 %v1313, 65535
        %v1318 = vshrl.u32 %v1313, 16
        %v1319 = vmul.u32 %v1315, %v1317
        %v1320 = vmul.u32 %v1315, %v1318
        %v1321 = vmul.u32 %v1316, %v1317
        %v1322 = vmul.u32 %v1316, %v1318
        %v1323 = vshll.u32 %v1320, 16
        %v1324 = vshrl.u32 %v1320, 16
        %v1325 = vshll.u32 %v1321, 16
        %v1326 = vshrl.u32 %v1321, 16
        %vm1327 = vc.u32 %v1319, %v1323
        %v1328 = vsel %vm1327, 1, 0
        %v1329 = vadd.s32 %v1319, %v1323
        %v1330 = vadd.s32 %v1322, %v1328
        %vm1331 = vc.u32 %v1329, %v1325
        %v1332 = vsel %vm1331, 1, 0
        %v1333 = vadd.s32 %v1329, %v1325
        %v1334 = vadd.s32 %v1330, %v1332
        %v1335 = vadd.s32 %v1334, %v1324
        %v1336 = vadd.s32 %v1335, %v1326
        %v1337 = vand.u32 %v1314, 65535
        %v1338 = vshrl.u32 %v1314, 16
        %v1339 = vand.u32 %v1309, 65535
        %v1340 = vshrl.u32 %v1309, 16
        %v1341 = vmul.u32 %v1337, %v1339
        %v1342 = vmul.u32 %v1337, %v1340
        %v1343 = vmul.u32 %v1338, %v1339
        %v1344 = vmul.u32 %v1338, %v1340
        %v1345 = vshll.u32 %v1342, 16
        %v1346 = vshrl.u32 %v1342, 16
        %v1347 = vshll.u32 %v1343, 16
        %v1348 = vshrl.u32 %v1343, 16
        %vm1349 = vc.u32 %v1341, %v1345
        %v1350 = vsel %vm1349, 1, 0
        %v1351 = vadd.s32 %v1341, %v1345
        %v1352 = vadd.s32 %v1344, %v1350
        %vm1353 = vc.u32 %v1351, %v1347
        %v1354 = vsel %vm1353, 1, 0
        %v1355 = vadd.s32 %v1351, %v1347
        %v1356 = vadd.s32 %v1352, %v1354
        %v1357 = vadd.s32 %v1356, %v1346
        %v1358 = vadd.s32 %v1357, %v1348
        %v1359 = vmul.u32 %v1314, %v1305
        %v1360 = vadd.s32 %v1336, %v1355
        %vm1361 = vc.u32 %v1336, %v1355
        %v1362 = vadd.s32 %v1358, 1
        %v1363 = vsel %vm1361, %v1362, %v1358
        %v1364 = vadd.s32 %v1359, %v1363
        %v1365 = vadd.s32 %v1364, 536870912
        %v1366 = vshrl.u32 %v1365, 30
        %v1367 = vshll.u32 %v1366, 30
        %v1368 = vsub.s32 %v1364, %v1367
        %vm1369 = vcmp.lt.s32.totalorder %v1368, 0
        %v1370 = vsub.s32 0, %v1368
        %v1371 = vsel %vm1369, %v1370, %v1368
        %v1372 = vclz %v1371
        %v1373 = vsub.s32 %v1372, 2
        %vm1374 = vcmp.gt.s32.totalorder 0, %v1373
        %v1375 = vsel %vm1374, 0, %v1373
        %v1376 = vsub.s32 32, %v1375
        %v1377 = vshll.u32 %v1368, %v1375
        %v1378 = vshrl.u32 %v1360, %v1376
        %v1379 = vor.u32 %v1377, %v1378
        %v1380 = vsub.s32 4294967266, %v1375
        %v1381 = vadd.s32 %v1380, 127
        %v1382 = vshll.u32 %v1381, 23
        %v1383 = vor.u32 4788187, %v1382
        %v1384 = vand.u32 2147483647, %v1383
        %v1386 = vcvt.s32.f32 %v1379
        %v1387 = vmul.f32 %v1386, %v1384
        %v1388 = vxor.u32 %v1387, 2147483648
        %v1389 = vsel %vm1268, %v1388, %v1387
        %v1390 = vsub.s32 4, %v1366
        %v1391 = vsel %vm1268, %v1390, %v1366
        %v1392 = vsel %vm1267, %v1265, %v1389
        %v1393 = vsel %vm1267, 0, %v1391
        %v1394 = vmul.f32 %v1392, %v1392
        %v1395 = vmul.f32 %v1394, -0.001358992
        %v1396 = vadd.f32 %v1395, 0.041655596
        %v1397 = vmul.f32 %v1394, %v1396
        %v1398 = vadd.f32 %v1397, -0.4999988
        %v1399 = vmul.f32 %v1394, %v1398
        %v1400 = vadd.f32 1.0, %v1399
        %v1401 = vmul.f32 %v1392, %v1392
        %v1402 = vmul.f32 %v1401, -0.00019511016
        %v1403 = vadd.f32 %v1402, 0.008332121
        %v1404 = vmul.f32 %v1401, %v1403
        %v1405 = vadd.f32 %v1404, -0.16666654
        %v1406 = vmul.f32 %v1401, %v1405
        %v1407 = vadd.f32 %v1406, 1.0
        %v1408 = vmul.f32 %v1407, %v1392
        %vm1409 = vweird.f32 %v1265
        %v1410 = vadd.s32 %v1393, 3
        %v1411 = vand.u32 %v1410, 3
        %vm1412 = vcmp.lt.s32.totalorder %v1411, 2
        %vm1413 = vcmp.eq.s32.totalorder %v1411, 0
        %v1414 = vxor.u32 %v1408, 2147483648
        %v1415 = vsel %vm1413, %v1400, %v1414
        %vm1416 = vcmp.eq.s32.totalorder %v1411, 2
        %v1417 = vxor.u32 %v1400, 2147483648
        %v1418 = vsel %vm1416, %v1417, %v1408
        %v1419 = vsel %vm1412, %v1415, %v1418
        %v1420 = vsel %vm1409, nan, %v1419
        %v1422 = vsel %vm758, %v1261, 0
        %v1425 = vsel %vm758, %v1262, 0
        %v1428 = vsel %vm758, %v1263, 0
        %v1431 = vsel %vm758, %v1264, 0
        %v1434 = vsel %vm771, %v1420, 0
        %1436 = vmatpush.msra.mxu0 0.0
        %1437 = vmatpush.msra.mxu0 0.0
        %1438 = vmatpush.msra.mxu0 0.0
        %1439 = vmatpush.msra.mxu0 0.0
        %1440 = vmatpush.msra.mxu0 0.0
        %1441 = vmatpush.msra.mxu0 0.0
        %1442 = vmatpush.msra.mxu0 0.0
        %1443 = vmatpush.msra.mxu0 0.0
        %1444 = vmatpush.msra.mxu0 0.0
        %1445 = vmatpush.msra.mxu0 0.0
        %1446 = vmatpush.msra.mxu0 0.0
        %1447 = vmatpush.msra.mxu0 0.0
        %1448 = vmatpush.msra.mxu0 0.0
        %1449 = vmatpush.msra.mxu0 0.0
        %1450 = vmatpush.msra.mxu0 0.0
        %1451 = vmatpush.msra.mxu0 %v1434
        %1452 = vmatmul.f32.gmra.mxu0 %v1422
        %v1453 = vpop.f32.mrf.mxu0
        %v1454 = vadd.f32 0.0, %v1453
        %1455 = vmatmul.f32.gmra.mxu0 %v1425
        %v1456 = vpop.f32.mrf.mxu0
        %v1457 = vadd.f32 0.0, %v1456
        %1458 = vmatmul.f32.gmra.mxu0 %v1428
        %v1459 = vpop.f32.mrf.mxu0
        %v1460 = vadd.f32 0.0, %v1459
        %1461 = vmatmul.f32.gmra.mxu0 %v1431
        %v1462 = vpop.f32.mrf.mxu0
        %v1463 = vadd.f32 0.0, %v1462
        %1464 = vdwg.mxu0
        %v1465 = vadd.f32 %v1257, %v1454
        %v1466 = vadd.f32 %v1258, %v1457
        %v1467 = vadd.f32 %v1259, %v1460
        %v1468 = vadd.f32 %v1260, %v1463
        %v1469 = vld [vmem:[%s9] sm:$0xff]
        %v1470 = vld [vmem:[%s9 + $0x8] sm:$0xff]
        %v1471 = vld [vmem:[%s9 + $0x10] sm:$0xff]
        %v1472 = vld [vmem:[%s9 + $0x18] sm:$0xff]
        %v1473 = vand.u32 2147483647, %v1265
        %vm1474 = vcmp.le.f32.partialorder %v1473, 0.7853982
        %vm1475 = vcmp.lt.s32.totalorder %v1265, 0
        %v1476 = vand.u32 %v1265, 2139095040
        %v1477 = vshrl.u32 %v1476, 23
        %v1478 = vsub.s32 %v1477, 127
        %v1479 = vand.u32 2147483647, %v1265
        %v1480 = vand.u32 %v1479, 8388607
        %v1481 = vor.u32 %v1480, 8388608
        %v1482 = vsub.s32 0, %v1481
        %v1483 = vadd.s32 %v1478, 1
        %vm1484 = vcmp.gt.s32.totalorder %v1483, 0
        %v1485 = vsel %vm1484, %v1483, 0
        %v1486 = vshrl.u32 %v1485, 5
        %v1487 = vand.u32 %v1485, 31
        %v1488 = vsub.s32 32, %v1487
        %v1489 = vshrl.u32 683565275, %v1488
        %v1490 = vshll.u32 683565275, %v1487
        %v1491 = vshrl.u32 2475754826, %v1488
        %v1492 = vor.u32 %v1490, %v1491
        %v1493 = vshll.u32 2475754826, %v1487
        %v1494 = vshrl.u32 2131351028, %v1488
        %v1495 = vor.u32 %v1493, %v1494
        %v1496 = vshll.u32 2131351028, %v1487
        %v1497 = vshrl.u32 2102212464, %v1488
        %v1498 = vor.u32 %v1496, %v1497
        %v1499 = vshll.u32 2102212464, %v1487
        %v1500 = vshrl.u32 920167782, %v1488
        %v1501 = vor.u32 %v1499, %v1500
        %v1502 = vshll.u32 920167782, %v1487
        %v1503 = vshrl.u32 1326507024, %v1488
        %v1504 = vor.u32 %v1502, %v1503
        %vm1505 = vcmp.lt.s32.totalorder %v1486, 1
        %vm1506 = vcmp.lt.s32.totalorder %v1486, 2
        %vm1507 = vcmp.lt.s32.totalorder %v1486, 3
        %vm1508 = vcmp.lt.s32.totalorder %v1486, 4
        %v1509 = vsel %vm1505, %v1489, %v1492
        %v1510 = vsel %vm1508, %v1498, 2102212464
        %v1511 = vsel %vm1507, %v1495, %v1510
        %v1512 = vsel %vm1506, %v1509, %v1511
        %v1513 = vsel %vm1505, %v1492, %v1495
        %v1514 = vsel %vm1508, %v1501, 920167782
        %v1515 = vsel %vm1507, %v1498, %v1514
        %v1516 = vsel %vm1506, %v1513, %v1515
        %v1517 = vsel %vm1505, %v1495, %v1498
        %v1518 = vsel %vm1508, %v1504, 1326507024
        %v1519 = vsel %vm1507, %v1501, %v1518
        %v1520 = vsel %vm1506, %v1517, %v1519
        %v1521 = vshll.u32 %v1481, 8
        %v1522 = vand.u32 %v1521, 65535
        %v1523 = vshrl.u32 %v1521, 16
        %v1524 = vand.u32 %v1520, 65535
        %v1525 = vshrl.u32 %v1520, 16
        %v1526 = vmul.u32 %v1522, %v1524
        %v1527 = vmul.u32 %v1522, %v1525
        %v1528 = vmul.u32 %v1523, %v1524
        %v1529 = vmul.u32 %v1523, %v1525
        %v1530 = vshll.u32 %v1527, 16
        %v1531 = vshrl.u32 %v1527, 16
        %v1532 = vshll.u32 %v1528, 16
        %v1533 = vshrl.u32 %v1528, 16
        %vm1534 = vc.u32 %v1526, %v1530
        %v1535 = vsel %vm1534, 1, 0
        %v1536 = vadd.s32 %v1526, %v1530
        %v1537 = vadd.s32 %v1529, %v1535
        %vm1538 = vc.u32 %v1536, %v1532
        %v1539 = vsel %vm1538, 1, 0
        %v1540 = vadd.s32 %v1536, %v1532
        %v1541 = vadd.s32 %v1537, %v1539
        %v1542 = vadd.s32 %v1541, %v1531
        %v1543 = vadd.s32 %v1542, %v1533
        %v1544 = vand.u32 %v1521, 65535
        %v1545 = vshrl.u32 %v1521, 16
        %v1546 = vand.u32 %v1516, 65535
        %v1547 = vshrl.u32 %v1516, 16
        %v1548 = vmul.u32 %v1544, %v1546
        %v1549 = vmul.u32 %v1544, %v1547
        %v1550 = vmul.u32 %v1545, %v1546
        %v1551 = vmul.u32 %v1545, %v1547
        %v1552 = vshll.u32 %v1549, 16
        %v1553 = vshrl.u32 %v1549, 16
        %v1554 = vshll.u32 %v1550, 16
        %v1555 = vshrl.u32 %v1550, 16
        %vm1556 = vc.u32 %v1548, %v1552
        %v1557 = vsel %vm1556, 1, 0
        %v1558 = vadd.s32 %v1548, %v1552
        %v1559 = vadd.s32 %v1551, %v1557
        %vm1560 = vc.u32 %v1558, %v1554
        %v1561 = vsel %vm1560, 1, 0
        %v1562 = vadd.s32 %v1558, %v1554
        %v1563 = vadd.s32 %v1559, %v1561
        %v1564 = vadd.s32 %v1563, %v1553
        %v1565 = vadd.s32 %v1564, %v1555
        %v1566 = vmul.u32 %v1521, %v1512
        %v1567 = vadd.s32 %v1543, %v1562
        %vm1568 = vc.u32 %v1543, %v1562
        %v1569 = vadd.s32 %v1565, 1
        %v1570 = vsel %vm1568, %v1569, %v1565
        %v1571 = vadd.s32 %v1566, %v1570
        %v1572 = vadd.s32 %v1571, 536870912
        %v1573 = vshrl.u32 %v1572, 30
        %v1574 = vshll.u32 %v1573, 30
        %v1575 = vsub.s32 %v1571, %v1574
        %vm1576 = vcmp.lt.s32.totalorder %v1575, 0
        %v1577 = vsub.s32 0, %v1575
        %v1578 = vsel %vm1576, %v1577, %v1575
        %v1579 = vclz %v1578
        %v1580 = vsub.s32 %v1579, 2
        %vm1581 = vcmp.gt.s32.totalorder 0, %v1580
        %v1582 = vsel %vm1581, 0, %v1580
        %v1583 = vsub.s32 32, %v1582
        %v1584 = vshll.u32 %v1575, %v1582
        %v1585 = vshrl.u32 %v1567, %v1583
        %v1586 = vor.u32 %v1584, %v1585
        %v1587 = vsub.s32 4294967266, %v1582
        %v1588 = vadd.s32 %v1587, 127
        %v1589 = vshll.u32 %v1588, 23
        %v1590 = vor.u32 4788187, %v1589
        %v1591 = vand.u32 2147483647, %v1590
        %v1593 = vcvt.s32.f32 %v1586
        %v1594 = vmul.f32 %v1593, %v1591
        %v1595 = vxor.u32 %v1594, 2147483648
        %v1596 = vsel %vm1475, %v1595, %v1594
        %v1597 = vsub.s32 4, %v1573
        %v1598 = vsel %vm1475, %v1597, %v1573
        %v1599 = vsel %vm1474, %v1265, %v1596
        %v1600 = vsel %vm1474, 0, %v1598
        %v1601 = vmul.f32 %v1599, %v1599
        %v1602 = vmul.f32 %v1601, -0.001358992
        %v1603 = vadd.f32 %v1602, 0.041655596
        %v1604 = vmul.f32 %v1601, %v1603
        %v1605 = vadd.f32 %v1604, -0.4999988
        %v1606 = vmul.f32 %v1601, %v1605
        %v1607 = vadd.f32 1.0, %v1606
        %v1608 = vmul.f32 %v1599, %v1599
        %v1609 = vmul.f32 %v1608, -0.00019511016
        %v1610 = vadd.f32 %v1609, 0.008332121
        %v1611 = vmul.f32 %v1608, %v1610
        %v1612 = vadd.f32 %v1611, -0.16666654
        %v1613 = vmul.f32 %v1608, %v1612
        %v1614 = vadd.f32 %v1613, 1.0
        %v1615 = vmul.f32 %v1614, %v1599
        %vm1616 = vweird.f32 %v1265
        %v1617 = vand.u32 %v1600, 3
        %vm1618 = vcmp.lt.s32.totalorder %v1617, 2
        %vm1619 = vcmp.eq.s32.totalorder %v1617, 0
        %v1620 = vxor.u32 %v1615, 2147483648
        %v1621 = vsel %vm1619, %v1607, %v1620
        %vm1622 = vcmp.eq.s32.totalorder %v1617, 2
        %v1623 = vxor.u32 %v1607, 2147483648
        %v1624 = vsel %vm1622, %v1623, %v1615
        %v1625 = vsel %vm1618, %v1621, %v1624
        %v1626 = vsel %vm1616, nan, %v1625
        %v1628 = vsel %vm758, %v1469, 0
        %v1631 = vsel %vm758, %v1470, 0
        %v1634 = vsel %vm758, %v1471, 0
        %v1637 = vsel %vm758, %v1472, 0
        %v1640 = vsel %vm771, %v1626, 0
        %1642 = vmatpush.msra.mxu0 0.0
        %1643 = vmatpush.msra.mxu0 0.0
        %1644 = vmatpush.msra.mxu0 0.0
        %1645 = vmatpush.msra.mxu0 0.0
        %1646 = vmatpush.msra.mxu0 0.0
        %1647 = vmatpush.msra.mxu0 0.0
        %1648 = vmatpush.msra.mxu0 0.0
        %1649 = vmatpush.msra.mxu0 0.0
        %1650 = vmatpush.msra.mxu0 0.0
        %1651 = vmatpush.msra.mxu0 0.0
        %1652 = vmatpush.msra.mxu0 0.0
        %1653 = vmatpush.msra.mxu0 0.0
        %1654 = vmatpush.msra.mxu0 0.0
        %1655 = vmatpush.msra.mxu0 0.0
        %1656 = vmatpush.msra.mxu0 0.0
        %1657 = vmatpush.msra.mxu0 %v1640
        %1658 = vmatmul.f32.gmra.mxu0 %v1628
        %v1659 = vpop.f32.mrf.mxu0
        %v1660 = vadd.f32 0.0, %v1659
        %1661 = vmatmul.f32.gmra.mxu0 %v1631
        %v1662 = vpop.f32.mrf.mxu0
        %v1663 = vadd.f32 0.0, %v1662
        %1664 = vmatmul.f32.gmra.mxu0 %v1634
        %v1665 = vpop.f32.mrf.mxu0
        %v1666 = vadd.f32 0.0, %v1665
        %1667 = vmatmul.f32.gmra.mxu0 %v1637
        %v1668 = vpop.f32.mrf.mxu0
        %v1669 = vadd.f32 0.0, %v1668
        %1670 = vdwg.mxu0
        %v1671 = vadd.f32 %v1465, %v1660
        %v1672 = vadd.f32 %v1466, %v1663
        %v1673 = vadd.f32 %v1467, %v1666
        %v1674 = vadd.f32 %v1468, %v1669
        %v1675 = vld [vmem:[%s10] sm:$0xff]
        %v1676 = vld [vmem:[%s10 + $0x8] sm:$0xff]
        %v1677 = vld [vmem:[%s10 + $0x10] sm:$0xff]
        %v1678 = vld [vmem:[%s10 + $0x18] sm:$0xff]
        %v1679 = vmul.f32 %v746, 4.0
        %v1680 = vand.u32 2147483647, %v1679
        %vm1681 = vcmp.le.f32.partialorder %v1680, 0.7853982
        %vm1682 = vcmp.lt.s32.totalorder %v1679, 0
        %v1683 = vand.u32 %v1679, 2139095040
        %v1684 = vshrl.u32 %v1683, 23
        %v1685 = vsub.s32 %v1684, 127
        %v1686 = vand.u32 2147483647, %v1679
        %v1687 = vand.u32 %v1686, 8388607
        %v1688 = vor.u32 %v1687, 8388608
        %v1689 = vsub.s32 0, %v1688
        %v1690 = vadd.s32 %v1685, 1
        %vm1691 = vcmp.gt.s32.totalorder %v1690, 0
        %v1692 = vsel %vm1691, %v1690, 0
        %v1693 = vshrl.u32 %v1692, 5
        %v1694 = vand.u32 %v1692, 31
        %v1695 = vsub.s32 32, %v1694
        %v1696 = vshrl.u32 683565275, %v1695
        %v1697 = vshll.u32 683565275, %v1694
        %v1698 = vshrl.u32 2475754826, %v1695
        %v1699 = vor.u32 %v1697, %v1698
        %v1700 = vshll.u32 2475754826, %v1694
        %v1701 = vshrl.u32 2131351028, %v1695
        %v1702 = vor.u32 %v1700, %v1701
        %v1703 = vshll.u32 2131351028, %v1694
        %v1704 = vshrl.u32 2102212464, %v1695
        %v1705 = vor.u32 %v1703, %v1704
        %v1706 = vshll.u32 2102212464, %v1694
        %v1707 = vshrl.u32 920167782, %v1695
        %v1708 = vor.u32 %v1706, %v1707
        %v1709 = vshll.u32 920167782, %v1694
        %v1710 = vshrl.u32 1326507024, %v1695
        %v1711 = vor.u32 %v1709, %v1710
        %vm1712 = vcmp.lt.s32.totalorder %v1693, 1
        %vm1713 = vcmp.lt.s32.totalorder %v1693, 2
        %vm1714 = vcmp.lt.s32.totalorder %v1693, 3
        %vm1715 = vcmp.lt.s32.totalorder %v1693, 4
        %v1716 = vsel %vm1712, %v1696, %v1699
        %v1717 = vsel %vm1715, %v1705, 2102212464
        %v1718 = vsel %vm1714, %v1702, %v1717
        %v1719 = vsel %vm1713, %v1716, %v1718
        %v1720 = vsel %vm1712, %v1699, %v1702
        %v1721 = vsel %vm1715, %v1708, 920167782
        %v1722 = vsel %vm1714, %v1705, %v1721
        %v1723 = vsel %vm1713, %v1720, %v1722
        %v1724 = vsel %vm1712, %v1702, %v1705
        %v1725 = vsel %vm1715, %v1711, 1326507024
        %v1726 = vsel %vm1714, %v1708, %v1725
        %v1727 = vsel %vm1713, %v1724, %v1726
        %v1728 = vshll.u32 %v1688, 8
        %v1729 = vand.u32 %v1728, 65535
        %v1730 = vshrl.u32 %v1728, 16
        %v1731 = vand.u32 %v1727, 65535
        %v1732 = vshrl.u32 %v1727, 16
        %v1733 = vmul.u32 %v1729, %v1731
        %v1734 = vmul.u32 %v1729, %v1732
        %v1735 = vmul.u32 %v1730, %v1731
        %v1736 = vmul.u32 %v1730, %v1732
        %v1737 = vshll.u32 %v1734, 16
        %v1738 = vshrl.u32 %v1734, 16
        %v1739 = vshll.u32 %v1735, 16
        %v1740 = vshrl.u32 %v1735, 16
        %vm1741 = vc.u32 %v1733, %v1737
        %v1742 = vsel %vm1741, 1, 0
        %v1743 = vadd.s32 %v1733, %v1737
        %v1744 = vadd.s32 %v1736, %v1742
        %vm1745 = vc.u32 %v1743, %v1739
        %v1746 = vsel %vm1745, 1, 0
        %v1747 = vadd.s32 %v1743, %v1739
        %v1748 = vadd.s32 %v1744, %v1746
        %v1749 = vadd.s32 %v1748, %v1738
        %v1750 = vadd.s32 %v1749, %v1740
        %v1751 = vand.u32 %v1728, 65535
        %v1752 = vshrl.u32 %v1728, 16
        %v1753 = vand.u32 %v1723, 65535
        %v1754 = vshrl.u32 %v1723, 16
        %v1755 = vmul.u32 %v1751, %v1753
        %v1756 = vmul.u32 %v1751, %v1754
        %v1757 = vmul.u32 %v1752, %v1753
        %v1758 = vmul.u32 %v1752, %v1754
        %v1759 = vshll.u32 %v1756, 16
        %v1760 = vshrl.u32 %v1756, 16
        %v1761 = vshll.u32 %v1757, 16
        %v1762 = vshrl.u32 %v1757, 16
        %vm1763 = vc.u32 %v1755, %v1759
        %v1764 = vsel %vm1763, 1, 0
        %v1765 = vadd.s32 %v1755, %v1759
        %v1766 = vadd.s32 %v1758, %v1764
        %vm1767 = vc.u32 %v1765, %v1761
        %v1768 = vsel %vm1767, 1, 0
        %v1769 = vadd.s32 %v1765, %v1761
        %v1770 = vadd.s32 %v1766, %v1768
        %v1771 = vadd.s32 %v1770, %v1760
        %v1772 = vadd.s32 %v1771, %v1762
        %v1773 = vmul.u32 %v1728, %v1719
        %v1774 = vadd.s32 %v1750, %v1769
        %vm1775 = vc.u32 %v1750, %v1769
        %v1776 = vadd.s32 %v1772, 1
        %v1777 = vsel %vm1775, %v1776, %v1772
        %v1778 = vadd.s32 %v1773, %v1777
        %v1779 = vadd.s32 %v1778, 536870912
        %v1780 = vshrl.u32 %v1779, 30
        %v1781 = vshll.u32 %v1780, 30
        %v1782 = vsub.s32 %v1778, %v1781
        %vm1783 = vcmp.lt.s32.totalorder %v1782, 0
        %v1784 = vsub.s32 0, %v1782
        %v1785 = vsel %vm1783, %v1784, %v1782
        %v1786 = vclz %v1785
        %v1787 = vsub.s32 %v1786, 2
        %vm1788 = vcmp.gt.s32.totalorder 0, %v1787
        %v1789 = vsel %vm1788, 0, %v1787
        %v1790 = vsub.s32 32, %v1789
        %v1791 = vshll.u32 %v1782, %v1789
        %v1792 = vshrl.u32 %v1774, %v1790
        %v1793 = vor.u32 %v1791, %v1792
        %v1794 = vsub.s32 4294967266, %v1789
        %v1795 = vadd.s32 %v1794, 127
        %v1796 = vshll.u32 %v1795, 23
        %v1797 = vor.u32 4788187, %v1796
        %v1798 = vand.u32 2147483647, %v1797
        %v1800 = vcvt.s32.f32 %v1793
        %v1801 = vmul.f32 %v1800, %v1798
        %v1802 = vxor.u32 %v1801, 2147483648
        %v1803 = vsel %vm1682, %v1802, %v1801
        %v1804 = vsub.s32 4, %v1780
        %v1805 = vsel %vm1682, %v1804, %v1780
        %v1806 = vsel %vm1681, %v1679, %v1803
        %v1807 = vsel %vm1681, 0, %v1805
        %v1808 = vmul.f32 %v1806, %v1806
        %v1809 = vmul.f32 %v1808, -0.001358992
        %v1810 = vadd.f32 %v1809, 0.041655596
        %v1811 = vmul.f32 %v1808, %v1810
        %v1812 = vadd.f32 %v1811, -0.4999988
        %v1813 = vmul.f32 %v1808, %v1812
        %v1814 = vadd.f32 1.0, %v1813
        %v1815 = vmul.f32 %v1806, %v1806
        %v1816 = vmul.f32 %v1815, -0.00019511016
        %v1817 = vadd.f32 %v1816, 0.008332121
        %v1818 = vmul.f32 %v1815, %v1817
        %v1819 = vadd.f32 %v1818, -0.16666654
        %v1820 = vmul.f32 %v1815, %v1819
        %v1821 = vadd.f32 %v1820, 1.0
        %v1822 = vmul.f32 %v1821, %v1806
        %vm1823 = vweird.f32 %v1679
        %v1824 = vadd.s32 %v1807, 3
        %v1825 = vand.u32 %v1824, 3
        %vm1826 = vcmp.lt.s32.totalorder %v1825, 2
        %vm1827 = vcmp.eq.s32.totalorder %v1825, 0
        %v1828 = vxor.u32 %v1822, 2147483648
        %v1829 = vsel %vm1827, %v1814, %v1828
        %vm1830 = vcmp.eq.s32.totalorder %v1825, 2
        %v1831 = vxor.u32 %v1814, 2147483648
        %v1832 = vsel %vm1830, %v1831, %v1822
        %v1833 = vsel %vm1826, %v1829, %v1832
        %v1834 = vsel %vm1823, nan, %v1833
        %v1836 = vsel %vm758, %v1675, 0
        %v1839 = vsel %vm758, %v1676, 0
        %v1842 = vsel %vm758, %v1677, 0
        %v1845 = vsel %vm758, %v1678, 0
        %v1848 = vsel %vm771, %v1834, 0
        %1850 = vmatpush.msra.mxu0 0.0
        %1851 = vmatpush.msra.mxu0 0.0
        %1852 = vmatpush.msra.mxu0 0.0
        %1853 = vmatpush.msra.mxu0 0.0
        %1854 = vmatpush.msra.mxu0 0.0
        %1855 = vmatpush.msra.mxu0 0.0
        %1856 = vmatpush.msra.mxu0 0.0
        %1857 = vmatpush.msra.mxu0 0.0
        %1858 = vmatpush.msra.mxu0 0.0
        %1859 = vmatpush.msra.mxu0 0.0
        %1860 = vmatpush.msra.mxu0 0.0
        %1861 = vmatpush.msra.mxu0 0.0
        %1862 = vmatpush.msra.mxu0 0.0
        %1863 = vmatpush.msra.mxu0 0.0
        %1864 = vmatpush.msra.mxu0 0.0
        %1865 = vmatpush.msra.mxu0 %v1848
        %1866 = vmatmul.f32.gmra.mxu0 %v1836
        %v1867 = vpop.f32.mrf.mxu0
        %v1868 = vadd.f32 0.0, %v1867
        %1869 = vmatmul.f32.gmra.mxu0 %v1839
        %v1870 = vpop.f32.mrf.mxu0
        %v1871 = vadd.f32 0.0, %v1870
        %1872 = vmatmul.f32.gmra.mxu0 %v1842
        %v1873 = vpop.f32.mrf.mxu0
        %v1874 = vadd.f32 0.0, %v1873
        %1875 = vmatmul.f32.gmra.mxu0 %v1845
        %v1876 = vpop.f32.mrf.mxu0
        %v1877 = vadd.f32 0.0, %v1876
        %1878 = vdwg.mxu0
        %v1879 = vadd.f32 %v1671, %v1868
        %v1880 = vadd.f32 %v1672, %v1871
        %v1881 = vadd.f32 %v1673, %v1874
        %v1882 = vadd.f32 %v1674, %v1877
        %v1883 = vld [vmem:[%s11] sm:$0xff]
        %v1884 = vld [vmem:[%s11 + $0x8] sm:$0xff]
        %v1885 = vld [vmem:[%s11 + $0x10] sm:$0xff]
        %v1886 = vld [vmem:[%s11 + $0x18] sm:$0xff]
        %v1887 = vand.u32 2147483647, %v1679
        %vm1888 = vcmp.le.f32.partialorder %v1887, 0.7853982
        %vm1889 = vcmp.lt.s32.totalorder %v1679, 0
        %v1890 = vand.u32 %v1679, 2139095040
        %v1891 = vshrl.u32 %v1890, 23
        %v1892 = vsub.s32 %v1891, 127
        %v1893 = vand.u32 2147483647, %v1679
        %v1894 = vand.u32 %v1893, 8388607
        %v1895 = vor.u32 %v1894, 8388608
        %v1896 = vsub.s32 0, %v1895
        %v1897 = vadd.s32 %v1892, 1
        %vm1898 = vcmp.gt.s32.totalorder %v1897, 0
        %v1899 = vsel %vm1898, %v1897, 0
        %v1900 = vshrl.u32 %v1899, 5
        %v1901 = vand.u32 %v1899, 31
        %v1902 = vsub.s32 32, %v1901
        %v1903 = vshrl.u32 683565275, %v1902
        %v1904 = vshll.u32 683565275, %v1901
        %v1905 = vshrl.u32 2475754826, %v1902
        %v1906 = vor.u32 %v1904, %v1905
        %v1907 = vshll.u32 2475754826, %v1901
        %v1908 = vshrl.u32 2131351028, %v1902
        %v1909 = vor.u32 %v1907, %v1908
        %v1910 = vshll.u32 2131351028, %v1901
        %v1911 = vshrl.u32 2102212464, %v1902
        %v1912 = vor.u32 %v1910, %v1911
        %v1913 = vshll.u32 2102212464, %v1901
        %v1914 = vshrl.u32 920167782, %v1902
        %v1915 = vor.u32 %v1913, %v1914
        %v1916 = vshll.u32 920167782, %v1901
        %v1917 = vshrl.u32 1326507024, %v1902
        %v1918 = vor.u32 %v1916, %v1917
        %vm1919 = vcmp.lt.s32.totalorder %v1900, 1
        %vm1920 = vcmp.lt.s32.totalorder %v1900, 2
        %vm1921 = vcmp.lt.s32.totalorder %v1900, 3
        %vm1922 = vcmp.lt.s32.totalorder %v1900, 4
        %v1923 = vsel %vm1919, %v1903, %v1906
        %v1924 = vsel %vm1922, %v1912, 2102212464
        %v1925 = vsel %vm1921, %v1909, %v1924
        %v1926 = vsel %vm1920, %v1923, %v1925
        %v1927 = vsel %vm1919, %v1906, %v1909
        %v1928 = vsel %vm1922, %v1915, 920167782
        %v1929 = vsel %vm1921, %v1912, %v1928
        %v1930 = vsel %vm1920, %v1927, %v1929
        %v1931 = vsel %vm1919, %v1909, %v1912
        %v1932 = vsel %vm1922, %v1918, 1326507024
        %v1933 = vsel %vm1921, %v1915, %v1932
        %v1934 = vsel %vm1920, %v1931, %v1933
        %v1935 = vshll.u32 %v1895, 8
        %v1936 = vand.u32 %v1935, 65535
        %v1937 = vshrl.u32 %v1935, 16
        %v1938 = vand.u32 %v1934, 65535
        %v1939 = vshrl.u32 %v1934, 16
        %v1940 = vmul.u32 %v1936, %v1938
        %v1941 = vmul.u32 %v1936, %v1939
        %v1942 = vmul.u32 %v1937, %v1938
        %v1943 = vmul.u32 %v1937, %v1939
        %v1944 = vshll.u32 %v1941, 16
        %v1945 = vshrl.u32 %v1941, 16
        %v1946 = vshll.u32 %v1942, 16
        %v1947 = vshrl.u32 %v1942, 16
        %vm1948 = vc.u32 %v1940, %v1944
        %v1949 = vsel %vm1948, 1, 0
        %v1950 = vadd.s32 %v1940, %v1944
        %v1951 = vadd.s32 %v1943, %v1949
        %vm1952 = vc.u32 %v1950, %v1946
        %v1953 = vsel %vm1952, 1, 0
        %v1954 = vadd.s32 %v1950, %v1946
        %v1955 = vadd.s32 %v1951, %v1953
        %v1956 = vadd.s32 %v1955, %v1945
        %v1957 = vadd.s32 %v1956, %v1947
        %v1958 = vand.u32 %v1935, 65535
        %v1959 = vshrl.u32 %v1935, 16
        %v1960 = vand.u32 %v1930, 65535
        %v1961 = vshrl.u32 %v1930, 16
        %v1962 = vmul.u32 %v1958, %v1960
        %v1963 = vmul.u32 %v1958, %v1961
        %v1964 = vmul.u32 %v1959, %v1960
        %v1965 = vmul.u32 %v1959, %v1961
        %v1966 = vshll.u32 %v1963, 16
        %v1967 = vshrl.u32 %v1963, 16
        %v1968 = vshll.u32 %v1964, 16
        %v1969 = vshrl.u32 %v1964, 16
        %vm1970 = vc.u32 %v1962, %v1966
        %v1971 = vsel %vm1970, 1, 0
        %v1972 = vadd.s32 %v1962, %v1966
        %v1973 = vadd.s32 %v1965, %v1971
        %vm1974 = vc.u32 %v1972, %v1968
        %v1975 = vsel %vm1974, 1, 0
        %v1976 = vadd.s32 %v1972, %v1968
        %v1977 = vadd.s32 %v1973, %v1975
        %v1978 = vadd.s32 %v1977, %v1967
        %v1979 = vadd.s32 %v1978, %v1969
        %v1980 = vmul.u32 %v1935, %v1926
        %v1981 = vadd.s32 %v1957, %v1976
        %vm1982 = vc.u32 %v1957, %v1976
        %v1983 = vadd.s32 %v1979, 1
        %v1984 = vsel %vm1982, %v1983, %v1979
        %v1985 = vadd.s32 %v1980, %v1984
        %v1986 = vadd.s32 %v1985, 536870912
        %v1987 = vshrl.u32 %v1986, 30
        %v1988 = vshll.u32 %v1987, 30
        %v1989 = vsub.s32 %v1985, %v1988
        %vm1990 = vcmp.lt.s32.totalorder %v1989, 0
        %v1991 = vsub.s32 0, %v1989
        %v1992 = vsel %vm1990, %v1991, %v1989
        %v1993 = vclz %v1992
        %v1994 = vsub.s32 %v1993, 2
        %vm1995 = vcmp.gt.s32.totalorder 0, %v1994
        %v1996 = vsel %vm1995, 0, %v1994
        %v1997 = vsub.s32 32, %v1996
        %v1998 = vshll.u32 %v1989, %v1996
        %v1999 = vshrl.u32 %v1981, %v1997
        %v2000 = vor.u32 %v1998, %v1999
        %v2001 = vsub.s32 4294967266, %v1996
        %v2002 = vadd.s32 %v2001, 127
        %v2003 = vshll.u32 %v2002, 23
        %v2004 = vor.u32 4788187, %v2003
        %v2005 = vand.u32 2147483647, %v2004
        %v2007 = vcvt.s32.f32 %v2000
        %v2008 = vmul.f32 %v2007, %v2005
        %v2009 = vxor.u32 %v2008, 2147483648
        %v2010 = vsel %vm1889, %v2009, %v2008
        %v2011 = vsub.s32 4, %v1987
        %v2012 = vsel %vm1889, %v2011, %v1987
        %v2013 = vsel %vm1888, %v1679, %v2010
        %v2014 = vsel %vm1888, 0, %v2012
        %v2015 = vmul.f32 %v2013, %v2013
        %v2016 = vmul.f32 %v2015, -0.001358992
        %v2017 = vadd.f32 %v2016, 0.041655596
        %v2018 = vmul.f32 %v2015, %v2017
        %v2019 = vadd.f32 %v2018, -0.4999988
        %v2020 = vmul.f32 %v2015, %v2019
        %v2021 = vadd.f32 1.0, %v2020
        %v2022 = vmul.f32 %v2013, %v2013
        %v2023 = vmul.f32 %v2022, -0.00019511016
        %v2024 = vadd.f32 %v2023, 0.008332121
        %v2025 = vmul.f32 %v2022, %v2024
        %v2026 = vadd.f32 %v2025, -0.16666654
        %v2027 = vmul.f32 %v2022, %v2026
        %v2028 = vadd.f32 %v2027, 1.0
        %v2029 = vmul.f32 %v2028, %v2013
        %vm2030 = vweird.f32 %v1679
        %v2031 = vand.u32 %v2014, 3
        %vm2032 = vcmp.lt.s32.totalorder %v2031, 2
        %vm2033 = vcmp.eq.s32.totalorder %v2031, 0
        %v2034 = vxor.u32 %v2029, 2147483648
        %v2035 = vsel %vm2033, %v2021, %v2034
        %vm2036 = vcmp.eq.s32.totalorder %v2031, 2
        %v2037 = vxor.u32 %v2021, 2147483648
        %v2038 = vsel %vm2036, %v2037, %v2029
        %v2039 = vsel %vm2032, %v2035, %v2038
        %v2040 = vsel %vm2030, nan, %v2039
        %v2042 = vsel %vm758, %v1883, 0
        %v2045 = vsel %vm758, %v1884, 0
        %v2048 = vsel %vm758, %v1885, 0
        %v2051 = vsel %vm758, %v1886, 0
        %v2054 = vsel %vm771, %v2040, 0
        %2056 = vmatpush.msra.mxu0 0.0
        %2057 = vmatpush.msra.mxu0 0.0
        %2058 = vmatpush.msra.mxu0 0.0
        %2059 = vmatpush.msra.mxu0 0.0
        %2060 = vmatpush.msra.mxu0 0.0
        %2061 = vmatpush.msra.mxu0 0.0
        %2062 = vmatpush.msra.mxu0 0.0
        %2063 = vmatpush.msra.mxu0 0.0
        %2064 = vmatpush.msra.mxu0 0.0
        %2065 = vmatpush.msra.mxu0 0.0
        %2066 = vmatpush.msra.mxu0 0.0
        %2067 = vmatpush.msra.mxu0 0.0
        %2068 = vmatpush.msra.mxu0 0.0
        %2069 = vmatpush.msra.mxu0 0.0
        %2070 = vmatpush.msra.mxu0 0.0
        %2071 = vmatpush.msra.mxu0 %v2054
        %2072 = vmatmul.f32.gmra.mxu0 %v2042
        %v2073 = vpop.f32.mrf.mxu0
        %v2074 = vadd.f32 0.0, %v2073
        %2075 = vmatmul.f32.gmra.mxu0 %v2045
        %v2076 = vpop.f32.mrf.mxu0
        %v2077 = vadd.f32 0.0, %v2076
        %2078 = vmatmul.f32.gmra.mxu0 %v2048
        %v2079 = vpop.f32.mrf.mxu0
        %v2080 = vadd.f32 0.0, %v2079
        %2081 = vmatmul.f32.gmra.mxu0 %v2051
        %v2082 = vpop.f32.mrf.mxu0
        %v2083 = vadd.f32 0.0, %v2082
        %2084 = vdwg.mxu0
        %v2085 = vadd.f32 %v1879, %v2074
        %v2086 = vadd.f32 %v1880, %v2077
        %v2087 = vadd.f32 %v1881, %v2080
        %v2088 = vadd.f32 %v1882, %v2083
        %v2089 = vld [vmem:[%s12] sm:$0xff]
        %v2090 = vld [vmem:[%s12 + $0x8] sm:$0xff]
        %v2091 = vld [vmem:[%s12 + $0x10] sm:$0xff]
        %v2092 = vld [vmem:[%s12 + $0x18] sm:$0xff]
        %v2093 = vmul.f32 %v746, 8.0
        %v2094 = vand.u32 2147483647, %v2093
        %vm2095 = vcmp.le.f32.partialorder %v2094, 0.7853982
        %vm2096 = vcmp.lt.s32.totalorder %v2093, 0
        %v2097 = vand.u32 %v2093, 2139095040
        %v2098 = vshrl.u32 %v2097, 23
        %v2099 = vsub.s32 %v2098, 127
        %v2100 = vand.u32 2147483647, %v2093
        %v2101 = vand.u32 %v2100, 8388607
        %v2102 = vor.u32 %v2101, 8388608
        %v2103 = vsub.s32 0, %v2102
        %v2104 = vadd.s32 %v2099, 1
        %vm2105 = vcmp.gt.s32.totalorder %v2104, 0
        %v2106 = vsel %vm2105, %v2104, 0
        %v2107 = vshrl.u32 %v2106, 5
        %v2108 = vand.u32 %v2106, 31
        %v2109 = vsub.s32 32, %v2108
        %v2110 = vshrl.u32 683565275, %v2109
        %v2111 = vshll.u32 683565275, %v2108
        %v2112 = vshrl.u32 2475754826, %v2109
        %v2113 = vor.u32 %v2111, %v2112
        %v2114 = vshll.u32 2475754826, %v2108
        %v2115 = vshrl.u32 2131351028, %v2109
        %v2116 = vor.u32 %v2114, %v2115
        %v2117 = vshll.u32 2131351028, %v2108
        %v2118 = vshrl.u32 2102212464, %v2109
        %v2119 = vor.u32 %v2117, %v2118
        %v2120 = vshll.u32 2102212464, %v2108
        %v2121 = vshrl.u32 920167782, %v2109
        %v2122 = vor.u32 %v2120, %v2121
        %v2123 = vshll.u32 920167782, %v2108
        %v2124 = vshrl.u32 1326507024, %v2109
        %v2125 = vor.u32 %v2123, %v2124
        %vm2126 = vcmp.lt.s32.totalorder %v2107, 1
        %vm2127 = vcmp.lt.s32.totalorder %v2107, 2
        %vm2128 = vcmp.lt.s32.totalorder %v2107, 3
        %vm2129 = vcmp.lt.s32.totalorder %v2107, 4
        %v2130 = vsel %vm2126, %v2110, %v2113
        %v2131 = vsel %vm2129, %v2119, 2102212464
        %v2132 = vsel %vm2128, %v2116, %v2131
        %v2133 = vsel %vm2127, %v2130, %v2132
        %v2134 = vsel %vm2126, %v2113, %v2116
        %v2135 = vsel %vm2129, %v2122, 920167782
        %v2136 = vsel %vm2128, %v2119, %v2135
        %v2137 = vsel %vm2127, %v2134, %v2136
        %v2138 = vsel %vm2126, %v2116, %v2119
        %v2139 = vsel %vm2129, %v2125, 1326507024
        %v2140 = vsel %vm2128, %v2122, %v2139
        %v2141 = vsel %vm2127, %v2138, %v2140
        %v2142 = vshll.u32 %v2102, 8
        %v2143 = vand.u32 %v2142, 65535
        %v2144 = vshrl.u32 %v2142, 16
        %v2145 = vand.u32 %v2141, 65535
        %v2146 = vshrl.u32 %v2141, 16
        %v2147 = vmul.u32 %v2143, %v2145
        %v2148 = vmul.u32 %v2143, %v2146
        %v2149 = vmul.u32 %v2144, %v2145
        %v2150 = vmul.u32 %v2144, %v2146
        %v2151 = vshll.u32 %v2148, 16
        %v2152 = vshrl.u32 %v2148, 16
        %v2153 = vshll.u32 %v2149, 16
        %v2154 = vshrl.u32 %v2149, 16
        %vm2155 = vc.u32 %v2147, %v2151
        %v2156 = vsel %vm2155, 1, 0
        %v2157 = vadd.s32 %v2147, %v2151
        %v2158 = vadd.s32 %v2150, %v2156
        %vm2159 = vc.u32 %v2157, %v2153
        %v2160 = vsel %vm2159, 1, 0
        %v2161 = vadd.s32 %v2157, %v2153
        %v2162 = vadd.s32 %v2158, %v2160
        %v2163 = vadd.s32 %v2162, %v2152
        %v2164 = vadd.s32 %v2163, %v2154
        %v2165 = vand.u32 %v2142, 65535
        %v2166 = vshrl.u32 %v2142, 16
        %v2167 = vand.u32 %v2137, 65535
        %v2168 = vshrl.u32 %v2137, 16
        %v2169 = vmul.u32 %v2165, %v2167
        %v2170 = vmul.u32 %v2165, %v2168
        %v2171 = vmul.u32 %v2166, %v2167
        %v2172 = vmul.u32 %v2166, %v2168
        %v2173 = vshll.u32 %v2170, 16
        %v2174 = vshrl.u32 %v2170, 16
        %v2175 = vshll.u32 %v2171, 16
        %v2176 = vshrl.u32 %v2171, 16
        %vm2177 = vc.u32 %v2169, %v2173
        %v2178 = vsel %vm2177, 1, 0
        %v2179 = vadd.s32 %v2169, %v2173
        %v2180 = vadd.s32 %v2172, %v2178
        %vm2181 = vc.u32 %v2179, %v2175
        %v2182 = vsel %vm2181, 1, 0
        %v2183 = vadd.s32 %v2179, %v2175
        %v2184 = vadd.s32 %v2180, %v2182
        %v2185 = vadd.s32 %v2184, %v2174
        %v2186 = vadd.s32 %v2185, %v2176
        %v2187 = vmul.u32 %v2142, %v2133
        %v2188 = vadd.s32 %v2164, %v2183
        %vm2189 = vc.u32 %v2164, %v2183
        %v2190 = vadd.s32 %v2186, 1
        %v2191 = vsel %vm2189, %v2190, %v2186
        %v2192 = vadd.s32 %v2187, %v2191
        %v2193 = vadd.s32 %v2192, 536870912
        %v2194 = vshrl.u32 %v2193, 30
        %v2195 = vshll.u32 %v2194, 30
        %v2196 = vsub.s32 %v2192, %v2195
        %vm2197 = vcmp.lt.s32.totalorder %v2196, 0
        %v2198 = vsub.s32 0, %v2196
        %v2199 = vsel %vm2197, %v2198, %v2196
        %v2200 = vclz %v2199
        %v2201 = vsub.s32 %v2200, 2
        %vm2202 = vcmp.gt.s32.totalorder 0, %v2201
        %v2203 = vsel %vm2202, 0, %v2201
        %v2204 = vsub.s32 32, %v2203
        %v2205 = vshll.u32 %v2196, %v2203
        %v2206 = vshrl.u32 %v2188, %v2204
        %v2207 = vor.u32 %v2205, %v2206
        %v2208 = vsub.s32 4294967266, %v2203
        %v2209 = vadd.s32 %v2208, 127
        %v2210 = vshll.u32 %v2209, 23
        %v2211 = vor.u32 4788187, %v2210
        %v2212 = vand.u32 2147483647, %v2211
        %v2214 = vcvt.s32.f32 %v2207
        %v2215 = vmul.f32 %v2214, %v2212
        %v2216 = vxor.u32 %v2215, 2147483648
        %v2217 = vsel %vm2096, %v2216, %v2215
        %v2218 = vsub.s32 4, %v2194
        %v2219 = vsel %vm2096, %v2218, %v2194
        %v2220 = vsel %vm2095, %v2093, %v2217
        %v2221 = vsel %vm2095, 0, %v2219
        %v2222 = vmul.f32 %v2220, %v2220
        %v2223 = vmul.f32 %v2222, -0.001358992
        %v2224 = vadd.f32 %v2223, 0.041655596
        %v2225 = vmul.f32 %v2222, %v2224
        %v2226 = vadd.f32 %v2225, -0.4999988
        %v2227 = vmul.f32 %v2222, %v2226
        %v2228 = vadd.f32 1.0, %v2227
        %v2229 = vmul.f32 %v2220, %v2220
        %v2230 = vmul.f32 %v2229, -0.00019511016
        %v2231 = vadd.f32 %v2230, 0.008332121
        %v2232 = vmul.f32 %v2229, %v2231
        %v2233 = vadd.f32 %v2232, -0.16666654
        %v2234 = vmul.f32 %v2229, %v2233
        %v2235 = vadd.f32 %v2234, 1.0
        %v2236 = vmul.f32 %v2235, %v2220
        %vm2237 = vweird.f32 %v2093
        %v2238 = vadd.s32 %v2221, 3
        %v2239 = vand.u32 %v2238, 3
        %vm2240 = vcmp.lt.s32.totalorder %v2239, 2
        %vm2241 = vcmp.eq.s32.totalorder %v2239, 0
        %v2242 = vxor.u32 %v2236, 2147483648
        %v2243 = vsel %vm2241, %v2228, %v2242
        %vm2244 = vcmp.eq.s32.totalorder %v2239, 2
        %v2245 = vxor.u32 %v2228, 2147483648
        %v2246 = vsel %vm2244, %v2245, %v2236
        %v2247 = vsel %vm2240, %v2243, %v2246
        %v2248 = vsel %vm2237, nan, %v2247
        %v2250 = vsel %vm758, %v2089, 0
        %v2253 = vsel %vm758, %v2090, 0
        %v2256 = vsel %vm758, %v2091, 0
        %v2259 = vsel %vm758, %v2092, 0
        %v2262 = vsel %vm771, %v2248, 0
        %2264 = vmatpush.msra.mxu0 0.0
        %2265 = vmatpush.msra.mxu0 0.0
        %2266 = vmatpush.msra.mxu0 0.0
        %2267 = vmatpush.msra.mxu0 0.0
        %2268 = vmatpush.msra.mxu0 0.0
        %2269 = vmatpush.msra.mxu0 0.0
        %2270 = vmatpush.msra.mxu0 0.0
        %2271 = vmatpush.msra.mxu0 0.0
        %2272 = vmatpush.msra.mxu0 0.0
        %2273 = vmatpush.msra.mxu0 0.0
        %2274 = vmatpush.msra.mxu0 0.0
        %2275 = vmatpush.msra.mxu0 0.0
        %2276 = vmatpush.msra.mxu0 0.0
        %2277 = vmatpush.msra.mxu0 0.0
        %2278 = vmatpush.msra.mxu0 0.0
        %2279 = vmatpush.msra.mxu0 %v2262
        %2280 = vmatmul.f32.gmra.mxu0 %v2250
        %v2281 = vpop.f32.mrf.mxu0
        %v2282 = vadd.f32 0.0, %v2281
        %2283 = vmatmul.f32.gmra.mxu0 %v2253
        %v2284 = vpop.f32.mrf.mxu0
        %v2285 = vadd.f32 0.0, %v2284
        %2286 = vmatmul.f32.gmra.mxu0 %v2256
        %v2287 = vpop.f32.mrf.mxu0
        %v2288 = vadd.f32 0.0, %v2287
        %2289 = vmatmul.f32.gmra.mxu0 %v2259
        %v2290 = vpop.f32.mrf.mxu0
        %v2291 = vadd.f32 0.0, %v2290
        %2292 = vdwg.mxu0
        %v2293 = vadd.f32 %v2085, %v2282
        %v2294 = vadd.f32 %v2086, %v2285
        %v2295 = vadd.f32 %v2087, %v2288
        %v2296 = vadd.f32 %v2088, %v2291
        %v2297 = vld [vmem:[%s13] sm:$0xff]
        %v2298 = vld [vmem:[%s13 + $0x8] sm:$0xff]
        %v2299 = vld [vmem:[%s13 + $0x10] sm:$0xff]
        %v2300 = vld [vmem:[%s13 + $0x18] sm:$0xff]
        %v2301 = vand.u32 2147483647, %v2093
        %vm2302 = vcmp.le.f32.partialorder %v2301, 0.7853982
        %vm2303 = vcmp.lt.s32.totalorder %v2093, 0
        %v2304 = vand.u32 %v2093, 2139095040
        %v2305 = vshrl.u32 %v2304, 23
        %v2306 = vsub.s32 %v2305, 127
        %v2307 = vand.u32 2147483647, %v2093
        %v2308 = vand.u32 %v2307, 8388607
        %v2309 = vor.u32 %v2308, 8388608
        %v2310 = vsub.s32 0, %v2309
        %v2311 = vadd.s32 %v2306, 1
        %vm2312 = vcmp.gt.s32.totalorder %v2311, 0
        %v2313 = vsel %vm2312, %v2311, 0
        %v2314 = vshrl.u32 %v2313, 5
        %v2315 = vand.u32 %v2313, 31
        %v2316 = vsub.s32 32, %v2315
        %v2317 = vshrl.u32 683565275, %v2316
        %v2318 = vshll.u32 683565275, %v2315
        %v2319 = vshrl.u32 2475754826, %v2316
        %v2320 = vor.u32 %v2318, %v2319
        %v2321 = vshll.u32 2475754826, %v2315
        %v2322 = vshrl.u32 2131351028, %v2316
        %v2323 = vor.u32 %v2321, %v2322
        %v2324 = vshll.u32 2131351028, %v2315
        %v2325 = vshrl.u32 2102212464, %v2316
        %v2326 = vor.u32 %v2324, %v2325
        %v2327 = vshll.u32 2102212464, %v2315
        %v2328 = vshrl.u32 920167782, %v2316
        %v2329 = vor.u32 %v2327, %v2328
        %v2330 = vshll.u32 920167782, %v2315
        %v2331 = vshrl.u32 1326507024, %v2316
        %v2332 = vor.u32 %v2330, %v2331
        %vm2333 = vcmp.lt.s32.totalorder %v2314, 1
        %vm2334 = vcmp.lt.s32.totalorder %v2314, 2
        %vm2335 = vcmp.lt.s32.totalorder %v2314, 3
        %vm2336 = vcmp.lt.s32.totalorder %v2314, 4
        %v2337 = vsel %vm2333, %v2317, %v2320
        %v2338 = vsel %vm2336, %v2326, 2102212464
        %v2339 = vsel %vm2335, %v2323, %v2338
        %v2340 = vsel %vm2334, %v2337, %v2339
        %v2341 = vsel %vm2333, %v2320, %v2323
        %v2342 = vsel %vm2336, %v2329, 920167782
        %v2343 = vsel %vm2335, %v2326, %v2342
        %v2344 = vsel %vm2334, %v2341, %v2343
        %v2345 = vsel %vm2333, %v2323, %v2326
        %v2346 = vsel %vm2336, %v2332, 1326507024
        %v2347 = vsel %vm2335, %v2329, %v2346
        %v2348 = vsel %vm2334, %v2345, %v2347
        %v2349 = vshll.u32 %v2309, 8
        %v2350 = vand.u32 %v2349, 65535
        %v2351 = vshrl.u32 %v2349, 16
        %v2352 = vand.u32 %v2348, 65535
        %v2353 = vshrl.u32 %v2348, 16
        %v2354 = vmul.u32 %v2350, %v2352
        %v2355 = vmul.u32 %v2350, %v2353
        %v2356 = vmul.u32 %v2351, %v2352
        %v2357 = vmul.u32 %v2351, %v2353
        %v2358 = vshll.u32 %v2355, 16
        %v2359 = vshrl.u32 %v2355, 16
        %v2360 = vshll.u32 %v2356, 16
        %v2361 = vshrl.u32 %v2356, 16
        %vm2362 = vc.u32 %v2354, %v2358
        %v2363 = vsel %vm2362, 1, 0
        %v2364 = vadd.s32 %v2354, %v2358
        %v2365 = vadd.s32 %v2357, %v2363
        %vm2366 = vc.u32 %v2364, %v2360
        %v2367 = vsel %vm2366, 1, 0
        %v2368 = vadd.s32 %v2364, %v2360
        %v2369 = vadd.s32 %v2365, %v2367
        %v2370 = vadd.s32 %v2369, %v2359
        %v2371 = vadd.s32 %v2370, %v2361
        %v2372 = vand.u32 %v2349, 65535
        %v2373 = vshrl.u32 %v2349, 16
        %v2374 = vand.u32 %v2344, 65535
        %v2375 = vshrl.u32 %v2344, 16
        %v2376 = vmul.u32 %v2372, %v2374
        %v2377 = vmul.u32 %v2372, %v2375
        %v2378 = vmul.u32 %v2373, %v2374
        %v2379 = vmul.u32 %v2373, %v2375
        %v2380 = vshll.u32 %v2377, 16
        %v2381 = vshrl.u32 %v2377, 16
        %v2382 = vshll.u32 %v2378, 16
        %v2383 = vshrl.u32 %v2378, 16
        %vm2384 = vc.u32 %v2376, %v2380
        %v2385 = vsel %vm2384, 1, 0
        %v2386 = vadd.s32 %v2376, %v2380
        %v2387 = vadd.s32 %v2379, %v2385
        %vm2388 = vc.u32 %v2386, %v2382
        %v2389 = vsel %vm2388, 1, 0
        %v2390 = vadd.s32 %v2386, %v2382
        %v2391 = vadd.s32 %v2387, %v2389
        %v2392 = vadd.s32 %v2391, %v2381
        %v2393 = vadd.s32 %v2392, %v2383
        %v2394 = vmul.u32 %v2349, %v2340
        %v2395 = vadd.s32 %v2371, %v2390
        %vm2396 = vc.u32 %v2371, %v2390
        %v2397 = vadd.s32 %v2393, 1
        %v2398 = vsel %vm2396, %v2397, %v2393
        %v2399 = vadd.s32 %v2394, %v2398
        %v2400 = vadd.s32 %v2399, 536870912
        %v2401 = vshrl.u32 %v2400, 30
        %v2402 = vshll.u32 %v2401, 30
        %v2403 = vsub.s32 %v2399, %v2402
        %vm2404 = vcmp.lt.s32.totalorder %v2403, 0
        %v2405 = vsub.s32 0, %v2403
        %v2406 = vsel %vm2404, %v2405, %v2403
        %v2407 = vclz %v2406
        %v2408 = vsub.s32 %v2407, 2
        %vm2409 = vcmp.gt.s32.totalorder 0, %v2408
        %v2410 = vsel %vm2409, 0, %v2408
        %v2411 = vsub.s32 32, %v2410
        %v2412 = vshll.u32 %v2403, %v2410
        %v2413 = vshrl.u32 %v2395, %v2411
        %v2414 = vor.u32 %v2412, %v2413
        %v2415 = vsub.s32 4294967266, %v2410
        %v2416 = vadd.s32 %v2415, 127
        %v2417 = vshll.u32 %v2416, 23
        %v2418 = vor.u32 4788187, %v2417
        %v2419 = vand.u32 2147483647, %v2418
        %v2421 = vcvt.s32.f32 %v2414
        %v2422 = vmul.f32 %v2421, %v2419
        %v2423 = vxor.u32 %v2422, 2147483648
        %v2424 = vsel %vm2303, %v2423, %v2422
        %v2425 = vsub.s32 4, %v2401
        %v2426 = vsel %vm2303, %v2425, %v2401
        %v2427 = vsel %vm2302, %v2093, %v2424
        %v2428 = vsel %vm2302, 0, %v2426
        %v2429 = vmul.f32 %v2427, %v2427
        %v2430 = vmul.f32 %v2429, -0.001358992
        %v2431 = vadd.f32 %v2430, 0.041655596
        %v2432 = vmul.f32 %v2429, %v2431
        %v2433 = vadd.f32 %v2432, -0.4999988
        %v2434 = vmul.f32 %v2429, %v2433
        %v2435 = vadd.f32 1.0, %v2434
        %v2436 = vmul.f32 %v2427, %v2427
        %v2437 = vmul.f32 %v2436, -0.00019511016
        %v2438 = vadd.f32 %v2437, 0.008332121
        %v2439 = vmul.f32 %v2436, %v2438
        %v2440 = vadd.f32 %v2439, -0.16666654
        %v2441 = vmul.f32 %v2436, %v2440
        %v2442 = vadd.f32 %v2441, 1.0
        %v2443 = vmul.f32 %v2442, %v2427
        %vm2444 = vweird.f32 %v2093
        %v2445 = vand.u32 %v2428, 3
        %vm2446 = vcmp.lt.s32.totalorder %v2445, 2
        %vm2447 = vcmp.eq.s32.totalorder %v2445, 0
        %v2448 = vxor.u32 %v2443, 2147483648
        %v2449 = vsel %vm2447, %v2435, %v2448
        %vm2450 = vcmp.eq.s32.totalorder %v2445, 2
        %v2451 = vxor.u32 %v2435, 2147483648
        %v2452 = vsel %vm2450, %v2451, %v2443
        %v2453 = vsel %vm2446, %v2449, %v2452
        %v2454 = vsel %vm2444, nan, %v2453
        %v2456 = vsel %vm758, %v2297, 0
        %v2459 = vsel %vm758, %v2298, 0
        %v2462 = vsel %vm758, %v2299, 0
        %v2465 = vsel %vm758, %v2300, 0
        %v2468 = vsel %vm771, %v2454, 0
        %2470 = vmatpush.msra.mxu0 0.0
        %2471 = vmatpush.msra.mxu0 0.0
        %2472 = vmatpush.msra.mxu0 0.0
        %2473 = vmatpush.msra.mxu0 0.0
        %2474 = vmatpush.msra.mxu0 0.0
        %2475 = vmatpush.msra.mxu0 0.0
        %2476 = vmatpush.msra.mxu0 0.0
        %2477 = vmatpush.msra.mxu0 0.0
        %2478 = vmatpush.msra.mxu0 0.0
        %2479 = vmatpush.msra.mxu0 0.0
        %2480 = vmatpush.msra.mxu0 0.0
        %2481 = vmatpush.msra.mxu0 0.0
        %2482 = vmatpush.msra.mxu0 0.0
        %2483 = vmatpush.msra.mxu0 0.0
        %2484 = vmatpush.msra.mxu0 0.0
        %2485 = vmatpush.msra.mxu0 %v2468
        %2486 = vmatmul.f32.gmra.mxu0 %v2456
        %v2487 = vpop.f32.mrf.mxu0
        %v2488 = vadd.f32 0.0, %v2487
        %2489 = vmatmul.f32.gmra.mxu0 %v2459
        %v2490 = vpop.f32.mrf.mxu0
        %v2491 = vadd.f32 0.0, %v2490
        %2492 = vmatmul.f32.gmra.mxu0 %v2462
        %v2493 = vpop.f32.mrf.mxu0
        %v2494 = vadd.f32 0.0, %v2493
        %2495 = vmatmul.f32.gmra.mxu0 %v2465
        %v2496 = vpop.f32.mrf.mxu0
        %v2497 = vadd.f32 0.0, %v2496
        %2498 = vdwg.mxu0
        %v2499 = vadd.f32 %v2293, %v2488
        %v2500 = vadd.f32 %v2294, %v2491
        %v2501 = vadd.f32 %v2295, %v2494
        %v2502 = vadd.f32 %v2296, %v2497
        %v2503 = vld [vmem:[%s14] sm:$0xff]
        %v2504 = vld [vmem:[%s14 + $0x8] sm:$0xff]
        %v2505 = vld [vmem:[%s14 + $0x10] sm:$0xff]
        %v2506 = vld [vmem:[%s14 + $0x18] sm:$0xff]
        %v2508 = vsel %vm758, %v2503, 0
        %v2511 = vsel %vm758, %v2504, 0
        %v2514 = vsel %vm758, %v2505, 0
        %v2517 = vsel %vm758, %v2506, 0
        %v2520 = vsel %vm771, %v747, 0
        %2522 = vmatpush.msra.mxu0 0.0
        %2523 = vmatpush.msra.mxu0 0.0
        %2524 = vmatpush.msra.mxu0 0.0
        %2525 = vmatpush.msra.mxu0 0.0
        %2526 = vmatpush.msra.mxu0 0.0
        %2527 = vmatpush.msra.mxu0 0.0
        %2528 = vmatpush.msra.mxu0 0.0
        %2529 = vmatpush.msra.mxu0 0.0
        %2530 = vmatpush.msra.mxu0 0.0
        %2531 = vmatpush.msra.mxu0 0.0
        %2532 = vmatpush.msra.mxu0 0.0
        %2533 = vmatpush.msra.mxu0 0.0
        %2534 = vmatpush.msra.mxu0 0.0
        %2535 = vmatpush.msra.mxu0 0.0
        %2536 = vmatpush.msra.mxu0 0.0
        %2537 = vmatpush.msra.mxu0 %v2520
        %2538 = vmatmul.f32.gmra.mxu0 %v2508
        %v2539 = vpop.f32.mrf.mxu0
        %v2540 = vadd.f32 0.0, %v2539
        %2541 = vmatmul.f32.gmra.mxu0 %v2511
        %v2542 = vpop.f32.mrf.mxu0
        %v2543 = vadd.f32 0.0, %v2542
        %2544 = vmatmul.f32.gmra.mxu0 %v2514
        %v2545 = vpop.f32.mrf.mxu0
        %v2546 = vadd.f32 0.0, %v2545
        %2547 = vmatmul.f32.gmra.mxu0 %v2517
        %v2548 = vpop.f32.mrf.mxu0
        %v2549 = vadd.f32 0.0, %v2548
        %2550 = vdwg.mxu0
        %v2551 = vadd.f32 %v2499, %v2540
        %v2552 = vadd.f32 %v2500, %v2543
        %v2553 = vadd.f32 %v2501, %v2546
        %v2554 = vadd.f32 %v2502, %v2549
        %v2555 = vld [vmem:[%s15] sm:$0xff]
        %v2556 = vld [vmem:[%s15 + $0x8] sm:$0xff]
        %v2557 = vld [vmem:[%s15 + $0x10] sm:$0xff]
        %v2558 = vld [vmem:[%s15 + $0x18] sm:$0xff]
        %vm2559 = vcmask 130048
        %v2561 = vsel %vm2559, %v2555, 0
        %v2564 = vsel %vm2559, %v2556, 0
        %v2567 = vsel %vm2559, %v2557, 0
        %v2570 = vsel %vm2559, %v2558, 0
        %2572 = vmatpush.msra.mxu0 0.0
        %2573 = vmatpush.msra.mxu0 0.0
        %2574 = vmatpush.msra.mxu0 0.0
        %2575 = vmatpush.msra.mxu0 0.0
        %2576 = vmatpush.msra.mxu0 0.0
        %2577 = vmatpush.msra.mxu0 0.0
        %2578 = vmatpush.msra.mxu0 0.0
        %2579 = vmatpush.msra.mxu0 0.0
        %2580 = vmatpush.msra.mxu0 0.0
        %2581 = vmatpush.msra.mxu0 0.0
        %2582 = vmatpush.msra.mxu0 0.0
        %2583 = vmatpush.msra.mxu0 0.0
        %2584 = vmatpush.msra.mxu0 0.0
        %2585 = vmatpush.msra.mxu0 0.0
        %2586 = vmatpush.msra.mxu0 %v749
        %2587 = vmatpush.msra.mxu0 %v748
        %2588 = vmatmul.f32.gmra.mxu0 %v2561
        %v2589 = vpop.f32.mrf.mxu0
        %v2590 = vadd.f32 0.0, %v2589
        %2591 = vmatmul.f32.gmra.mxu0 %v2564
        %v2592 = vpop.f32.mrf.mxu0
        %v2593 = vadd.f32 0.0, %v2592
        %2594 = vmatmul.f32.gmra.mxu0 %v2567
        %v2595 = vpop.f32.mrf.mxu0
        %v2596 = vadd.f32 0.0, %v2595
        %2597 = vmatmul.f32.gmra.mxu0 %v2570
        %v2598 = vpop.f32.mrf.mxu0
        %v2599 = vadd.f32 0.0, %v2598
        %2600 = vdwg.mxu0
        %v2601 = vadd.f32 %v2551, %v2590
        %v2602 = vadd.f32 %v2552, %v2593
        %v2603 = vadd.f32 %v2553, %v2596
        %v2604 = vadd.f32 %v2554, %v2599
        %v2605 = vld [vmem:[%s16] sm:$0xff]
        %v2606 = vld [vmem:[%s16 + $0x8] sm:$0xff]
        %v2607 = vld [vmem:[%s16 + $0x10] sm:$0xff]
        %v2608 = vld [vmem:[%s16 + $0x18] sm:$0xff]
        %2610 = vset.pattern.permute.xlu0 0
        %2611 = vperm.xlu0 %2610, %v2605
        %v2612 = vpop.permute.xlu0 %2611
        %2615 = vset.pattern.permute.xlu0 0
        %2616 = vperm.xlu0 %2615, %v2606
        %v2617 = vpop.permute.xlu0 %2616
        %2620 = vset.pattern.permute.xlu0 0
        %2621 = vperm.xlu0 %2620, %v2607
        %v2622 = vpop.permute.xlu0 %2621
        %2625 = vset.pattern.permute.xlu0 0
        %2626 = vperm.xlu0 %2625, %v2608
        %v2627 = vpop.permute.xlu0 %2626
        %v2629 = vadd.f32 %v2601, %v2612
        %v2630 = vadd.f32 %v2602, %v2617
        %v2631 = vadd.f32 %v2603, %v2622
        %v2632 = vadd.f32 %v2604, %v2627
        %v2633 = vmax.f32 %v2629, 0.0
        %v2634 = vmax.f32 %v2630, 0.0
        %v2635 = vmax.f32 %v2631, 0.0
        %v2636 = vmax.f32 %v2632, 0.0
        %v2637 = vld [vmem:[%s17] sm:$0xff]
        %v2638 = vld [vmem:[%s17 + $0x8] sm:$0xff]
        %v2639 = vld [vmem:[%s17 + $0x10] sm:$0xff]
        %v2640 = vld [vmem:[%s17 + $0x18] sm:$0xff]
        %v2641 = vld [vmem:[%s18] sm:$0xff]
        %v2642 = vld [vmem:[%s18 + $0x8] sm:$0xff]
        %v2643 = vld [vmem:[%s18 + $0x10] sm:$0xff]
        %v2644 = vld [vmem:[%s18 + $0x18] sm:$0xff]
        %2646 = vset.pattern.permute.xlu0 0
        %2647 = vperm.xlu0 %2646, %v2641
        %v2648 = vpop.permute.xlu0 %2647
        %2651 = vset.pattern.permute.xlu0 0
        %2652 = vperm.xlu0 %2651, %v2642
        %v2653 = vpop.permute.xlu0 %2652
        %2656 = vset.pattern.permute.xlu0 0
        %2657 = vperm.xlu0 %2656, %v2643
        %v2658 = vpop.permute.xlu0 %2657
        %2661 = vset.pattern.permute.xlu0 0
        %2662 = vperm.xlu0 %2661, %v2644
        %v2663 = vpop.permute.xlu0 %2662
        %vm2665 = vcmask 261120
        %v2667 = vsel %vm2665, %v2637, 0
        %v2670 = vsel %vm2665, %v2638, 0
        %v2673 = vsel %vm2665, %v2639, 0
        %v2676 = vsel %vm2665, %v2640, 0
        %2678 = vmatpush.msra.mxu0 0.0
        %2679 = vmatpush.msra.mxu0 0.0
        %2680 = vmatpush.msra.mxu0 0.0
        %2681 = vmatpush.msra.mxu0 0.0
        %2682 = vmatpush.msra.mxu0 0.0
        %2683 = vmatpush.msra.mxu0 0.0
        %2684 = vmatpush.msra.mxu0 0.0
        %2685 = vmatpush.msra.mxu0 0.0
        %2686 = vmatpush.msra.mxu0 0.0
        %2687 = vmatpush.msra.mxu0 0.0
        %2688 = vmatpush.msra.mxu0 0.0
        %2689 = vmatpush.msra.mxu0 0.0
        %2690 = vmatpush.msra.mxu0 %v2636
        %2691 = vmatpush.msra.mxu0 %v2635
        %2692 = vmatpush.msra.mxu0 %v2634
        %2693 = vmatpush.msra.mxu0 %v2633
        %2694 = vmatmul.f32.gmra.mxu0 %v2667
        %v2695 = vpop.f32.mrf.mxu0
        %v2696 = vadd.f32 %v2648, %v2695
        %2697 = vmatmul.f32.gmra.mxu0 %v2670
        %v2698 = vpop.f32.mrf.mxu0
        %v2699 = vadd.f32 %v2653, %v2698
        %2700 = vmatmul.f32.gmra.mxu0 %v2673
        %v2701 = vpop.f32.mrf.mxu0
        %v2702 = vadd.f32 %v2658, %v2701
        %2703 = vmatmul.f32.gmra.mxu0 %v2676
        %v2704 = vpop.f32.mrf.mxu0
        %v2705 = vadd.f32 %v2663, %v2704
        %2706 = vdwg.mxu0
        %v2707 = vmax.f32 %v2696, 0.0
        %v2708 = vmax.f32 %v2699, 0.0
        %v2709 = vmax.f32 %v2702, 0.0
        %v2710 = vmax.f32 %v2705, 0.0
        %v2711 = vld [vmem:[%s19] sm:$0x7]
        %v2712 = vld [vmem:[%s20] sm:$0x7]
        %2714 = vset.pattern.permute.xlu0 0
        %2715 = vperm.xlu0 %2714, %v2712
        %v2716 = vpop.permute.xlu0 %2715
        %v2719 = vsel %vm2665, %v2711, 0
        %2721 = vmatpush.msra.mxu0 0.0
        %2722 = vmatpush.msra.mxu0 0.0
        %2723 = vmatpush.msra.mxu0 0.0
        %2724 = vmatpush.msra.mxu0 0.0
        %2725 = vmatpush.msra.mxu0 0.0
        %2726 = vmatpush.msra.mxu0 0.0
        %2727 = vmatpush.msra.mxu0 0.0
        %2728 = vmatpush.msra.mxu0 0.0
        %2729 = vmatpush.msra.mxu0 0.0
        %2730 = vmatpush.msra.mxu0 0.0
        %2731 = vmatpush.msra.mxu0 0.0
        %2732 = vmatpush.msra.mxu0 0.0
        %2733 = vmatpush.msra.mxu0 %v2710
        %2734 = vmatpush.msra.mxu0 %v2709
        %2735 = vmatpush.msra.mxu0 %v2708
        %2736 = vmatpush.msra.mxu0 %v2707
        %2737 = vmatmul.f32.gmra.mxu0 %v2719
        %v2738 = vpop.f32.mrf.mxu0
        %v2739 = vadd.f32 %v2716, %v2738
        %2740 = vdwg.mxu0
        %v2741 = vand.u32 2147483647, %v2739
        %v2742 = vsub.f32 0.0, %v2741
        %v2743 = vmul.f32 %v2742, 1.442695
        %v2744 = vpow.pop %v2743
        %vm2745 = vcmp.ge.f32.partialorder %v2739, 0.0
        %v2746 = vadd.f32 %v2744, 1.0
        %v2747 = vrcp.pop %v2746
        %v2748 = vmul.f32 %v2746, %v2747
        %v2749 = vsub.f32 1.0, %v2748
        %v2750 = vmul.f32 %v2747, %v2749
        %v2751 = vadd.f32 %v2747, %v2750
        %vm2752 = vweird.f32 %v2746
        %vm2753 = vweird.f32 %v2747
        %vm2754 = vmor %vm2752, %vm2753
        %v2755 = vsel %vm2754, %v2747, %v2751
        %v2756 = vand.u32 2147483647, %v2746
        %vm2757 = vcmp.eq.f32.partialorder %v2756, 8.507059e+37
        %v2758 = vand.u32 %v2746, 2147483648
        %v2759 = vor.u32 1.1754944e-38, %v2758
        %v2760 = vsel %vm2757, %v2759, %v2755
        %v2761 = vmul.f32 1.0, %v2760
        %v2762 = vmul.f32 %v2744, %v2760
        %v2763 = vsel %vm2745, %v2761, %v2762
        %2764 = vst [vmem:[%s732] sm:$0x7] %v2763
        %s2765 = sand.u32 %s504, 1
        %s2766 = scalar_lea.sflag [#allocation4], %s2765
        %s2767 = sand.u32 %s504, 1
        %s2768 = smul.addr %s2767, 4
        %s2769 = scalar_lea.vmem [#allocation3], %s2768
        // Predicated region
        $region143: #{tpu_custom_call.1} parent=137 // pred_check
          %p2770 = pneg %p514
        $region144: #{tpu_custom_call.1} parent=137 // pred_check_branch
          %2772 = sbr.rel (%p2770) target = $region146
        $region145: #{tpu_custom_call.1} parent=137 // pred_region
          %2774 = vsyncadd %s2766, 0
          %s2775 = smul.addr %s35, 4
          %s2776 = scalar_lea.hbm %s21, %s2775
          %s2778 = sshll.u32 %s2769, 4
          %s2779 = int_to_ptr.vmem [resolvable:$true] %s2778
          %s2780 = sshll.u32 %s2776, 4
          %s2781 = int_to_ptr.hbm [resolvable:$true] %s2780
          %2783 = dma.vmem_to_hbm [thread:$0]  %s2779, 64, %s2781, %s2766
        $region146: #{tpu_custom_call.1} parent=137 // pred_fallthru
          _
      $region138: #{tpu_custom_call.1} parent=5 // pred_fallthru
        _
      %p2784 = scmp.le.s32.totalorder 2, %s30
      // Predicated region
      $region147: #{tpu_custom_call.1} parent=5 // pred_check
        %p2785 = pneg %p2784
      $region148: #{tpu_custom_call.1} parent=5 // pred_check_branch
        %2787 = sbr.rel (%p2785) target = $region150
      $region149: #{tpu_custom_call.1} parent=5 // pred_region
        %s2788 = ssub.s32 %s30, 2
        // Predicated region
        $region151: #{tpu_custom_call.1} parent=149 // pred_check
          %p2789 = pneg %p520
        $region152: #{tpu_custom_call.1} parent=149 // pred_check_branch
          %2791 = sbr.rel (%p2789) target = $region154
        $region153: #{tpu_custom_call.1} parent=149 // pred_region
          %s2792 = sand.u32 %s505, 1
          %s2793 = scalar_lea.sflag [#allocation4], %s2792
          %s2794 = sand.u32 %s505, 1
          %s2795 = smul.addr %s2794, 4
          %s2796 = scalar_lea.vmem [#allocation3], %s2795
          %2798 = dma.done %s2793, 64
        $region154: #{tpu_custom_call.1} parent=149 // pred_fallthru
          _
      $region150: #{tpu_custom_call.1} parent=5 // pred_fallthru
        _
    $region6: #{tpu_custom_call.1} parent=1 // loop_footer
      %s34 = sadd.s32 1, %s30
    $region7: #{tpu_custom_call.1} parent=1 // loop_footer_branch
      %29 = sbr.rel target = $region3
    $region8: #{tpu_custom_call.1} parent=1 // loop_exit
      _
    %2799 = vsyncpa [#allocation4], 1
    %s2800 = scalar_lea.sflag [#allocation4], 1
    %2801 = vsyncpa %s2800, 1

</llo_original>
